<compile_context>
chip_gen: v7x
topology: tpu7x:2x2x1
jax: 0.10.0
libtpu: 0.0.40
codegen_flags: <defaults>
</compile_context>

<pallas_src>
from functools import partial

import jax
import jax.numpy as jnp
from jax import lax
from jax.experimental import pallas as pl
from jax.experimental.pallas import tpu as pltpu


def _round_up(x, m):
    return ((x + m - 1) // m) * m


def _vmem_budget_bytes():
    # Conservative default that is valid on every generation (v7x has 64 MiB
    # per TensorCore); grow if the runtime reports a larger VMEM (v5e/v6e).
    per_core = 64 * 1024 * 1024
    try:
        info = pltpu.get_tpu_info()
        per_core = int(getattr(info, "vmem_capacity_bytes", per_core))
    except Exception:
        pass
    per_core = min(per_core, 128 * 1024 * 1024)
    return max(32 * 1024 * 1024, per_core - 24 * 1024 * 1024)


def _per_col_bytes(d, k, in_bytes, out_bytes):
    # double-buffered I/O tiles + f32 (K,T)/(D,T) temporaries per lane column
    return 2 * d * in_bytes + 2 * d * out_bytes + 2 * 4 + 24 * k + 16 * d


def _choose_tile_hw(hw, d, k, in_bytes, out_bytes, budget, batch):
    per_col = _per_col_bytes(d, k, in_bytes, out_bytes)
    cap = (budget // 2) // per_col            # 2x headroom for compiler scratch
    cap = max(128, min(cap, 64 * 1024))       # >64k columns gives no extra win
    if hw <= cap:
        if batch >= 2 or hw <= 256:
            return hw
        # split small single-batch problems into >=2 grid steps so both
        # TensorCores of a v7x megacore get work.
        return min(hw, _round_up(-(-hw // 2), 128))
    return max(128, (cap // 128) * 128)


def _vq_kernel(x_ref, emb_m2_ref, emb_t_ref, e_sq_ref,
               quant_ref, idx_ref, sse_ref, hist_ref, *, hw):
    # x_ref:      (D, T)   input tile, batch dim squeezed, HW on lanes
    # emb_m2_ref: (K, D)   -2 * codebook          (loop invariant)
    # emb_t_ref:  (D, K)   codebook^T             (loop invariant)
    # e_sq_ref:   (K, 1)   ||e_k||^2              (loop invariant)
    # quant_ref:  (D, T)   quantized tile (input dtype)
    # idx_ref:    (1, T)   int32 argmin codebook indices
    # sse_ref:    (1,1,1,128) per-tile sum((quant - x)^2) (broadcast row)
    # hist_ref:   (1,1,K,1)   per-tile codebook-usage histogram
    i = pl.program_id(1)
    tile = x_ref.shape[-1]

    x = x_ref[...].astype(jnp.float32)                      # (D, T)
    emb_m2 = emb_m2_ref[...]                                 # (K, D)
    emb_t = emb_t_ref[...]                                   # (D, K)
    e_sq = e_sq_ref[...]                                     # (K, 1)
    num_codes = emb_m2.shape[0]

    # argmin_k ||x - e_k||^2 == argmin_k (||e_k||^2 - 2 e_k . x); the per-row
    # ||x||^2 term is constant in k and dropped (distances never leave kernel).
    dist = e_sq + jnp.dot(emb_m2, x,
                          preferred_element_type=jnp.float32,
                          precision=lax.Precision.HIGHEST)   # (K, T) MXU

    row = lax.broadcasted_iota(jnp.int32, dist.shape, 0)      # (K, T)
    min_d = jnp.min(dist, axis=0, keepdims=True)              # (1, T)
    # argmin with lowest-index tie-breaking (deterministic)
    idx = jnp.min(jnp.where(dist == min_d, row, jnp.int32(num_codes)),
                  axis=0, keepdims=True)                      # (1, T)

    # one-hot stays in VMEM only (never written back to HBM)
    enc = (row == idx).astype(jnp.float32)                    # (K, T)

    # quantized = E^T @ one_hot  (codebook gather on the MXU); HIGHEST
    # precision reproduces the exact f32 codebook rows.
    quant = jnp.dot(emb_t, enc,
                    preferred_element_type=jnp.float32,
                    precision=lax.Precision.HIGHEST)          # (D, T)

    quant_ref[...] = quant.astype(quant_ref.dtype)
    idx_ref[...] = idx

    # Mask the ragged tail columns of the last HW tile (OOB reads are garbage
    # and must not leak into the fused reductions).
    col = lax.broadcasted_iota(jnp.int32, (1, tile), 1)
    valid = (col + i * tile) < hw                             # (1, T) bool

    diff2 = jnp.where(valid, (quant - x) ** 2, 0.0)           # (D, T)
    sse = jnp.sum(jnp.sum(diff2, axis=1, keepdims=True), axis=0, keepdims=True)
    sse_ref[...] = jnp.broadcast_to(sse, sse_ref.shape)

    hist = jnp.sum(jnp.where(valid, enc, 0.0), axis=1, keepdims=True)  # (K, 1)
    hist_ref[...] = hist.reshape(hist_ref.shape)


def vector_quantizer_forward(x_nchw, embedding, commitment_cost):
    """Mirrors VectorQuantizer.forward (forward values only).

    Returns (loss, quantized_nchw, perplexity, encodings).
    """
    B, C, H, W = x_nchw.shape
    K, D = embedding.shape
    assert D == C, "embedding_dim must equal channel count"
    HW = H * W
    N = B * HW

    # (B,C,H,W) -> (B,C,H*W): free reshape, no HBM transpose. Column order
    # within a batch element is (h, w) -- identical to the NHWC flatten.
    x3 = x_nchw.reshape(B, C, HW)

    emb = embedding.astype(jnp.float32)                  # (K, D)
    emb_m2 = -2.0 * emb                                  # fold -2 into matmul
    emb_t = emb.T                                        # (D, K) hoisted transpose
    e_sq = jnp.sum(emb * emb, axis=1, keepdims=True)     # (K, 1) hoisted ||e||^2

    in_bytes = x_nchw.dtype.itemsize
    budget = _vmem_budget_bytes()
    tile_hw = _choose_tile_hw(HW, D, K, in_bytes, in_bytes, budget, B)
    grid_hw = -(-HW // tile_hw)
    grid = (B, grid_hw)

    needed = _per_col_bytes(D, K, in_bytes, in_bytes) * tile_hw + 64 * 1024
    vmem_limit = int(max(32 * 1024 * 1024,
                         min(budget, needed + 16 * 1024 * 1024)))

    kernel = partial(_vq_kernel, hw=HW)

    quant3, idx3, sse_part, hist_part = pl.pallas_call(
        kernel,
        out_shape=(
            jax.ShapeDtypeStruct((B, D, HW), x_nchw.dtype),
            jax.ShapeDtypeStruct((B, 1, HW), jnp.int32),
            jax.ShapeDtypeStruct((B, grid_hw, 1, 128), jnp.float32),
            jax.ShapeDtypeStruct((B, grid_hw, K, 1), jnp.float32),
        ),
        grid_spec=pltpu.PrefetchScalarGridSpec(
            num_scalar_prefetch=0,
            grid=grid,
            in_specs=[
                pl.BlockSpec((None, D, tile_hw), lambda b, i: (b, 0, i)),
                pl.BlockSpec((K, D), lambda b, i: (0, 0)),
                pl.BlockSpec((D, K), lambda b, i: (0, 0)),
                pl.BlockSpec((K, 1), lambda b, i: (0, 0)),
            ],
            out_specs=[
                pl.BlockSpec((None, D, tile_hw), lambda b, i: (b, 0, i)),
                pl.BlockSpec((None, 1, tile_hw), lambda b, i: (b, 0, i)),
                pl.BlockSpec((1, 1, 1, 128), lambda b, i: (b, i, 0, 0)),
                pl.BlockSpec((1, 1, K, 1), lambda b, i: (b, i, 0, 0)),
            ],
        ),
        compiler_params=pltpu.CompilerParams(
            dimension_semantics=("parallel", "parallel"),
            vmem_limit_bytes=vmem_limit,
        ),
    )(x3, emb_m2, emb_t, e_sq)

    # quantized back to NCHW: free reshape, no transpose.
    quant_nchw = quant3.reshape(B, C, H, W)

    # indices in (b, h, w) row order == PyTorch NHWC flatten order
    idx_n = idx3.reshape(N)

    # dense one-hot return value (required by the module interface); the
    # perplexity below does NOT depend on re-reading this array.
    encodings = jax.nn.one_hot(idx_n, K, dtype=jnp.float32)   # (N, K)

    # fused-in-kernel MSE: q_latent_loss and e_latent_loss share the same
    # forward value; .detach() only affects gradients.
    # TODO(synk): detach()/straight-through gradient semantics are not
    # represented (forward values only).
    sse_total = jnp.sum(sse_part[:, :, 0, 0])
    mse = sse_total / jnp.float32(N * D)
    loss = mse + commitment_cost * mse

    # perplexity from the fused per-tile histogram (== mean(encodings, 0))
    hist_total = jnp.sum(hist_part[:, :, :, 0], axis=(0, 1))  # (K,)
    avg_probs = hist_total / jnp.float32(N)
    perplexity = jnp.exp(-jnp.sum(avg_probs * jnp.log(avg_probs + 1e-10)))

    return loss, quant_nchw, perplexity, encodings


if __name__ == "__main__":
    num_embeddings = 16
    embedding_dim = 4
    commitment_cost = 0.25

    key = jax.random.PRNGKey(0)
    k_x, k_emb = jax.random.split(key)

    # input: NCHW, channels == embedding_dim
    x = jax.random.normal(k_x, (2, embedding_dim, 16, 16), dtype=jnp.float32)

    # deterministic embedding init: uniform(-1/K, 1/K) like the PyTorch module
    embedding = jax.random.uniform(
        k_emb, (num_embeddings, embedding_dim), dtype=jnp.float32,
        minval=-1.0 / num_embeddings, maxval=1.0 / num_embeddings)

    loss, quantized, perplexity, encodings = vector_quantizer_forward(
        x, embedding, commitment_cost)
    jax.block_until_ready((loss, quantized, perplexity, encodings))

    assert quantized.shape == x.shape
    assert quantized.dtype == x.dtype
    assert encodings.shape == (2 * 16 * 16, num_embeddings)
    print("KERNEL_OK")
</pallas_src>

<mosaic_0001>
module attributes {stable_mosaic.version = 11 : i64} {
  func.func @_vq_kernel(%arg0: i32, %arg1: i32, %arg2: memref<1x4x256xf32, #tpu.memory_space<vmem>>, %arg3: memref<16x4xf32, #tpu.memory_space<vmem>>, %arg4: memref<4x16xf32, #tpu.memory_space<vmem>>, %arg5: memref<16x1xf32, #tpu.memory_space<vmem>>, %arg6: memref<1x4x256xf32, #tpu.memory_space<vmem>>, %arg7: memref<1x1x256xi32, #tpu.memory_space<vmem>>, %arg8: memref<1x1x1x128xf32, #tpu.memory_space<vmem>>, %arg9: memref<1x1x16x1xf32, #tpu.memory_space<vmem>>) attributes {dimension_semantics = [#tpu.dimension_semantics<parallel>, #tpu.dimension_semantics<parallel>], iteration_bounds = array<i64: 2, 1>, scalar_prefetch = 0 : i64, scratch_operands = 0 : i64, tpu.core_type = #tpu.core_type<tc>, window_params = [{transform_indices = @transform_0, window_bounds = array<i64: 1, 4, 256>}, {pipeline_mode = #tpu.pipeline_mode<synchronous>, transform_indices = @transform_1, window_bounds = array<i64: 16, 4>}, {pipeline_mode = #tpu.pipeline_mode<synchronous>, transform_indices = @transform_2, window_bounds = array<i64: 4, 16>}, {pipeline_mode = #tpu.pipeline_mode<synchronous>, transform_indices = @transform_3, window_bounds = array<i64: 16, 1>}, {transform_indices = @transform_4, window_bounds = array<i64: 1, 4, 256>}, {transform_indices = @transform_5, window_bounds = array<i64: 1, 1, 256>}, {transform_indices = @transform_6, window_bounds = array<i64: 1, 1, 1, 128>}, {transform_indices = @transform_7, window_bounds = array<i64: 1, 1, 16, 1>}]} {
    %c0 = arith.constant 0 : index
    %c0_0 = arith.constant 0 : index
    %c0_1 = arith.constant 0 : index
    %0 = vector.load %arg2[%c0, %c0_0, %c0_1] : memref<1x4x256xf32, #tpu.memory_space<vmem>>, vector<1x4x256xf32>
    %1 = vector.shape_cast %0 : vector<1x4x256xf32> to vector<4x256xf32>
    %c0_2 = arith.constant 0 : index
    %c0_3 = arith.constant 0 : index
    %2 = vector.load %arg3[%c0_2, %c0_3] : memref<16x4xf32, #tpu.memory_space<vmem>>, vector<16x4xf32>
    %c0_4 = arith.constant 0 : index
    %c0_5 = arith.constant 0 : index
    %3 = vector.load %arg4[%c0_4, %c0_5] : memref<4x16xf32, #tpu.memory_space<vmem>>, vector<4x16xf32>
    %c0_6 = arith.constant 0 : index
    %c0_7 = arith.constant 0 : index
    %4 = vector.load %arg5[%c0_6, %c0_7] : memref<16x1xf32, #tpu.memory_space<vmem>>, vector<16x1xf32>
    %cst = arith.constant dense<0.000000e+00> : vector<16x256xf32>
    %5 = tpu.matmul %2, %1, %cst {dimension_numbers = #tpu.dot_dimension_numbers<[1], [0], [0], [1], [0, 0, 1, 1], [], []>, precision = #tpu.contract_precision<fp32>} : vector<16x4xf32>, vector<4x256xf32>, vector<16x256xf32> -> vector<16x256xf32>
    %6 = vector.broadcast %4 : vector<16x1xf32> to vector<16x256xf32>
    %7 = arith.addf %6, %5 : vector<16x256xf32>
    %8 = tpu.iota {dimensions = array<i32: 0>} : vector<16x256xi32>
    %cst_8 = arith.constant dense<0x7F800000> : vector<256xf32>
    %9 = vector.multi_reduction <minimumf>, %7, %cst_8 [0] : vector<16x256xf32> to vector<256xf32>
    %10 = vector.shape_cast %9 : vector<256xf32> to vector<1x256xf32>
    %11 = vector.broadcast %10 : vector<1x256xf32> to vector<16x256xf32>
    %12 = arith.cmpf oeq, %7, %11 : vector<16x256xf32>
    %c16_i32 = arith.constant 16 : i32
    %13 = vector.broadcast %c16_i32 : i32 to vector<16x256xi32>
    %14 = arith.select %12, %8, %13 : vector<16x256xi1>, vector<16x256xi32>
    %cst_9 = arith.constant dense<2147483647> : vector<256xi32>
    %15 = vector.multi_reduction <minsi>, %14, %cst_9 [0] : vector<16x256xi32> to vector<256xi32>
    %16 = vector.shape_cast %15 : vector<256xi32> to vector<1x256xi32>
    %17 = vector.broadcast %16 : vector<1x256xi32> to vector<16x256xi32>
    %18 = arith.cmpi eq, %8, %17 : vector<16x256xi32>
    %19 = arith.extui %18 : vector<16x256xi1> to vector<16x256xi32>
    %20 = arith.sitofp %19 : vector<16x256xi32> to vector<16x256xf32>
    %cst_10 = arith.constant dense<0.000000e+00> : vector<4x256xf32>
    %21 = tpu.matmul %3, %20, %cst_10 {dimension_numbers = #tpu.dot_dimension_numbers<[1], [0], [0], [1], [0, 0, 1, 1], [], []>, precision = #tpu.contract_precision<fp32>} : vector<4x16xf32>, vector<16x256xf32>, vector<4x256xf32> -> vector<4x256xf32>
    %c0_11 = arith.constant 0 : index
    %c0_12 = arith.constant 0 : index
    %c0_13 = arith.constant 0 : index
    %22 = vector.load %arg6[%c0_11, %c0_12, %c0_13] : memref<1x4x256xf32, #tpu.memory_space<vmem>>, vector<1x4x256xf32>
    %23 = vector.shape_cast %22 : vector<1x4x256xf32> to vector<4x256xf32>
    %24 = vector.shape_cast %21 : vector<4x256xf32> to vector<1x4x256xf32>
    tpu.vector_store %arg6[%c0_11, %c0_12, %c0_13], %24 {strides = array<i32>} : memref<1x4x256xf32, #tpu.memory_space<vmem>>, vector<1x4x256xf32>,
    %c0_14 = arith.constant 0 : index
    %c0_15 = arith.constant 0 : index
    %c0_16 = arith.constant 0 : index
    %25 = vector.load %arg7[%c0_14, %c0_15, %c0_16] : memref<1x1x256xi32, #tpu.memory_space<vmem>>, vector<1x1x256xi32>
    %26 = vector.shape_cast %25 : vector<1x1x256xi32> to vector<1x256xi32>
    %27 = vector.shape_cast %16 : vector<1x256xi32> to vector<1x1x256xi32>
    tpu.vector_store %arg7[%c0_14, %c0_15, %c0_16], %27 {strides = array<i32>} : memref<1x1x256xi32, #tpu.memory_space<vmem>>, vector<1x1x256xi32>,
    %28 = tpu.iota {dimensions = array<i32: 1>} : vector<1x256xi32>
    %c256_i32 = arith.constant 256 : i32
    %29 = arith.muli %arg1, %c256_i32 : i32
    %30 = vector.broadcast %29 : i32 to vector<1x256xi32>
    %31 = arith.addi %28, %30 : vector<1x256xi32>
    %c256_i32_17 = arith.constant 256 : i32
    %32 = vector.broadcast %c256_i32_17 : i32 to vector<1x256xi32>
    %33 = arith.cmpi slt, %31, %32 : vector<1x256xi32>
    %34 = arith.subf %21, %1 : vector<4x256xf32>
    %35 = arith.mulf %34, %34 : vector<4x256xf32>
    %cst_18 = arith.constant 0.000000e+00 : f32
    %36 = vector.shape_cast %33 : vector<1x256xi1> to vector<1x256xi1>
    %37 = vector.broadcast %36 : vector<1x256xi1> to vector<4x256xi1>
    %38 = vector.broadcast %cst_18 : f32 to vector<4x256xf32>
    %39 = arith.select %37, %35, %38 : vector<4x256xi1>, vector<4x256xf32>
    %cst_19 = arith.constant dense<0.000000e+00> : vector<4xf32>
    %40 = vector.multi_reduction <add>, %39, %cst_19 [1] : vector<4x256xf32> to vector<4xf32>
    %41 = vector.shape_cast %40 : vector<4xf32> to vector<4x1xf32>
    %cst_20 = arith.constant dense<0.000000e+00> : vector<1xf32>
    %42 = vector.multi_reduction <add>, %41, %cst_20 [0] : vector<4x1xf32> to vector<1xf32>
    %43 = vector.shape_cast %42 : vector<1xf32> to vector<1x1xf32>
    %44 = vector.shape_cast %43 : vector<1x1xf32> to vector<1x1x1x1xf32>
    %45 = vector.broadcast %44 : vector<1x1x1x1xf32> to vector<1x1x1x128xf32>
    %c0_21 = arith.constant 0 : index
    %c0_22 = arith.constant 0 : index
    %c0_23 = arith.constant 0 : index
    %c0_24 = arith.constant 0 : index
    %46 = vector.load %arg8[%c0_21, %c0_22, %c0_23, %c0_24] : memref<1x1x1x128xf32, #tpu.memory_space<vmem>>, vector<1x1x1x128xf32>
    tpu.vector_store %arg8[%c0_21, %c0_22, %c0_23, %c0_24], %45 {strides = array<i32>} : memref<1x1x1x128xf32, #tpu.memory_space<vmem>>, vector<1x1x1x128xf32>,
    %cst_25 = arith.constant 0.000000e+00 : f32
    %47 = vector.shape_cast %33 : vector<1x256xi1> to vector<1x256xi1>
    %48 = vector.broadcast %47 : vector<1x256xi1> to vector<16x256xi1>
    %49 = vector.broadcast %cst_25 : f32 to vector<16x256xf32>
    %50 = arith.select %48, %20, %49 : vector<16x256xi1>, vector<16x256xf32>
    %cst_26 = arith.constant dense<0.000000e+00> : vector<16xf32>
    %51 = vector.multi_reduction <add>, %50, %cst_26 [1] : vector<16x256xf32> to vector<16xf32>
    %52 = vector.shape_cast %51 : vector<16xf32> to vector<16x1xf32>
    %53 = vector.shape_cast %52 : vector<16x1xf32> to vector<1x1x16x1xf32>
    %c0_27 = arith.constant 0 : index
    %c0_28 = arith.constant 0 : index
    %c0_29 = arith.constant 0 : index
    %c0_30 = arith.constant 0 : index
    %54 = vector.load %arg9[%c0_27, %c0_28, %c0_29, %c0_30] : memref<1x1x16x1xf32, #tpu.memory_space<vmem>>, vector<1x1x16x1xf32>
    tpu.vector_store %arg9[%c0_27, %c0_28, %c0_29, %c0_30], %53 {strides = array<i32>} : memref<1x1x16x1xf32, #tpu.memory_space<vmem>>, vector<1x1x16x1xf32>,
    return
  }
  func.func @transform_0(%arg0: i32, %arg1: i32) -> (i32, i32, i32) {
    %c0_i32 = arith.constant 0 : i32
    %c0_i32_0 = arith.constant 0 : i32
    return %arg0, %c0_i32, %arg1 : i32, i32, i32
  }
  func.func @transform_1(%arg0: i32, %arg1: i32) -> (i32, i32) {
    %c0_i32 = arith.constant 0 : i32
    %c0_i32_0 = arith.constant 0 : i32
    %c0_i32_1 = arith.constant 0 : i32
    return %c0_i32, %c0_i32_0 : i32, i32
  }
  func.func @transform_2(%arg0: i32, %arg1: i32) -> (i32, i32) {
    %c0_i32 = arith.constant 0 : i32
    %c0_i32_0 = arith.constant 0 : i32
    %c0_i32_1 = arith.constant 0 : i32
    return %c0_i32, %c0_i32_0 : i32, i32
  }
  func.func @transform_3(%arg0: i32, %arg1: i32) -> (i32, i32) {
    %c0_i32 = arith.constant 0 : i32
    %c0_i32_0 = arith.constant 0 : i32
    %c0_i32_1 = arith.constant 0 : i32
    return %c0_i32, %c0_i32_0 : i32, i32
  }
  func.func @transform_4(%arg0: i32, %arg1: i32) -> (i32, i32, i32) {
    %c0_i32 = arith.constant 0 : i32
    %c0_i32_0 = arith.constant 0 : i32
    return %arg0, %c0_i32, %arg1 : i32, i32, i32
  }
  func.func @transform_5(%arg0: i32, %arg1: i32) -> (i32, i32, i32) {
    %c0_i32 = arith.constant 0 : i32
    %c0_i32_0 = arith.constant 0 : i32
    return %arg0, %c0_i32, %arg1 : i32, i32, i32
  }
  func.func @transform_6(%arg0: i32, %arg1: i32) -> (i32, i32, i32, i32) {
    %c0_i32 = arith.constant 0 : i32
    %c0_i32_0 = arith.constant 0 : i32
    %c0_i32_1 = arith.constant 0 : i32
    return %arg0, %arg1, %c0_i32, %c0_i32_0 : i32, i32, i32, i32
  }
  func.func @transform_7(%arg0: i32, %arg1: i32) -> (i32, i32, i32, i32) {
    %c0_i32 = arith.constant 0 : i32
    %c0_i32_0 = arith.constant 0 : i32
    %c0_i32_1 = arith.constant 0 : i32
    return %arg0, %arg1, %c0_i32, %c0_i32_0 : i32, i32, i32, i32
  }
}

</mosaic_0001>

<llo_original>
// kernel: tpu_custom_call.1
$region0: #{tpu_custom_call.1}
  #allocation0 [shape = 'u32[]', space=smem, size = 0x4, offset = 0x4, fixed_abs, tag = 'smem constant byte address 0x4 - core index']
  #allocation1 [shape = 'u32[144,128]{1,0:T(1,128)}', space=vmem, size = 0x12000, scoped, tag = 'internal scratch']
  %s0 = inlined_call_operand.vmem [shape: f32[2,4,256], index: 0, kind: input, shape index: {}]
  %s1 = inlined_call_operand.vmem [shape: f32[16,4], index: 1, kind: input, shape index: {}]
  %s2 = inlined_call_operand.vmem [shape: f32[4,16], index: 2, kind: input, shape index: {}]
  %s3 = inlined_call_operand.vmem [shape: f32[16,1], index: 3, kind: input, shape index: {}]
  %s4 = inlined_call_operand.hbm [shape: f32[2,4,256], index: 4, kind: output, shape index: {0}]
  %s5 = inlined_call_operand.hbm [shape: s32[2,1,256], index: 5, kind: output, shape index: {1}]
  %s6 = inlined_call_operand.hbm [shape: f32[2,1,1,128], index: 6, kind: output, shape index: {2}]
  %s7 = inlined_call_operand.vmem [shape: f32[2,1,16,1], index: 7, kind: output, shape index: {3}]
  %8 = xla_tuple %s4, %s5, %s6, %s7
  %s9 = sld [smem:[#allocation0]]
  $region73: #{tpu_custom_call.1} parent=0
    _
  %s11 = ssub.s32 1, %s9
  %s12 = scalar_select 0, %s11, %s9
  $region1: #{tpu_custom_call.1} parent=0
    #allocation2 [shape = 'u8[8192]{0}', space=vmem, size = 0x2000, scoped, tag = 'output window, operand 0']
    #allocation3 [shape = 's32[2]{0}', space=sflag, size = 0x8, scoped, tag = 'scoped memory for tpu_custom_call.1']
    #allocation4 [shape = 'u8[2048]{0}', space=vmem, size = 0x800, scoped, tag = 'output window, operand 1']
    #allocation5 [shape = 's32[2]{0}', space=sflag, size = 0x8, scoped, tag = 'scoped memory for tpu_custom_call.1']
    #allocation6 [shape = 'u8[1024]{0}', space=vmem, size = 0x400, scoped, tag = 'output window, operand 2']
    %13 = vsyncpa [#allocation3], 0
    %s14 = scalar_lea.sflag [#allocation3], 1
    %15 = vsyncpa %s14, 0
    %16 = vsyncpa [#allocation5], 0
    %s17 = scalar_lea.sflag [#allocation5], 1
    %18 = vsyncpa %s17, 0
    loop: start=0, step=1, limit=4
    $region2: #{tpu_custom_call.1} parent=1 // loop_pre_header
      _
    $region3: #{tpu_custom_call.1} parent=1 // loop_header
      %s20 = sphi 0, %s24
      %p21 = scmp.ge.s32.totalorder %s20, 4
      %s27 = sphi 0, %s39
      %s28 = sphi 0, %s35
      %s29 = sphi 0, %s27
      %s30 = sphi 0, %s28
      %s31 = sphi 0, %s29
      %s32 = sphi 0, %s30
      %s44 = sphi 0, %s46
      %s47 = sphi 0, %s44
      %s48 = sphi 0, %s47
      %s64 = sphi 0, %s48
      %s68 = sphi 0, %s68
      %s70 = sphi 0, %s68
      %s71 = sphi 0, %s70
      %s85 = sphi 0, %s71
      %s89 = sphi 0, %s89
      %s91 = sphi 0, %s89
      %s92 = sphi 0, %s91
      %s106 = sphi 0, %s92
      %s110 = sphi 0, %s110
      %s112 = sphi 0, %s110
      %s113 = sphi 0, %s112
      %s127 = sphi 0, %s113
      %s135 = sphi 0, %s137
      %s138 = sphi 0, %s135
      %s139 = sphi 0, %s138
      %s155 = sphi 0, %s139
      %s163 = sphi 0, %s165
      %s166 = sphi 0, %s163
      %s167 = sphi 0, %s166
      %s183 = sphi 0, %s167
      %s191 = sphi 0, %s193
      %s194 = sphi 0, %s191
      %s195 = sphi 0, %s194
      %s211 = sphi 0, %s195
      %s219 = sphi 0, %s221
      %s222 = sphi 0, %s219
      %s223 = sphi 0, %s222
      %s239 = sphi 0, %s223
    $region4: #{tpu_custom_call.1} parent=1 // loop_header_branch
      %23 = sbr.rel (%p21) target = $region8
    $region5: #{tpu_custom_call.1} parent=1 // loop_body
      %s25 = ssub.s32 %s20, 1
      %s26 = ssub.s32 %s20, 2
      %s33 = sadd.s32 1, %s28
      %p34 = scmp.ge.s32.totalorder %s33, 1
      %s35 = scalar_select %p34, 0, %s33
      %s36 = sadd.s32 1, %s27
      %s37 = scalar_select %p34, %s36, %s27
      %p38 = scmp.ge.s32.totalorder %s37, 2
      %s39 = scalar_select %p38, 0, %s37
      %s40 = ssub.s32 %s27, %s39
      %s41 = ssub.s32 %s28, %s35
      %s42 = sor.u32 %s40, %s41
      %p43 = scmp.eq.s32.totalorder %s42, 0
      %s45 = sadd.s32 %s44, 1
      %s46 = scalar_select %p43, %s44, %s45
      %p49 = pneg %p43
      %p50 = scmp.eq.s32.totalorder %s20, 1
      %p51 = por %p49, %p50
      %p52 = scmp.ne.s32.totalorder %s44, %s47
      %p53 = scmp.eq.s32.totalorder %s20, 0
      %p54 = por %p52, %p53
      %p55 = scmp.ne.s32.totalorder %s44, %s47
      %p56 = scmp.eq.s32.totalorder %s25, 1
      %p57 = por %p55, %p56
      %p58 = scmp.ne.s32.totalorder %s47, %s48
      %p59 = scmp.eq.s32.totalorder %s25, 0
      %p60 = por %p58, %p59
      %p61 = scmp.ne.s32.totalorder %s47, %s48
      %p62 = scmp.eq.s32.totalorder %s26, 1
      %p63 = por %p61, %p62
      %p65 = scmp.ne.s32.totalorder %s48, %s64
      %p66 = scmp.eq.s32.totalorder %s26, 0
      %p67 = por %p65, %p66
      %s69 = sadd.s32 %s68, 1
      %p72 = scmp.eq.s32.totalorder %s20, 1
      %p73 = scmp.ne.s32.totalorder %s68, %s70
      %p74 = scmp.eq.s32.totalorder %s20, 0
      %p75 = por %p73, %p74
      %p76 = scmp.ne.s32.totalorder %s68, %s70
      %p77 = scmp.eq.s32.totalorder %s25, 1
      %p78 = por %p76, %p77
      %p79 = scmp.ne.s32.totalorder %s70, %s71
      %p80 = scmp.eq.s32.totalorder %s25, 0
      %p81 = por %p79, %p80
      %p82 = scmp.ne.s32.totalorder %s70, %s71
      %p83 = scmp.eq.s32.totalorder %s26, 1
      %p84 = por %p82, %p83
      %p86 = scmp.ne.s32.totalorder %s71, %s85
      %p87 = scmp.eq.s32.totalorder %s26, 0
      %p88 = por %p86, %p87
      %s90 = sadd.s32 %s89, 1
      %p93 = scmp.eq.s32.totalorder %s20, 1
      %p94 = scmp.ne.s32.totalorder %s89, %s91
      %p95 = scmp.eq.s32.totalorder %s20, 0
      %p96 = por %p94, %p95
      %p97 = scmp.ne.s32.totalorder %s89, %s91
      %p98 = scmp.eq.s32.totalorder %s25, 1
      %p99 = por %p97, %p98
      %p100 = scmp.ne.s32.totalorder %s91, %s92
      %p101 = scmp.eq.s32.totalorder %s25, 0
      %p102 = por %p100, %p101
      %p103 = scmp.ne.s32.totalorder %s91, %s92
      %p104 = scmp.eq.s32.totalorder %s26, 1
      %p105 = por %p103, %p104
      %p107 = scmp.ne.s32.totalorder %s92, %s106
      %p108 = scmp.eq.s32.totalorder %s26, 0
      %p109 = por %p107, %p108
      %s111 = sadd.s32 %s110, 1
      %p114 = scmp.eq.s32.totalorder %s20, 1
      %p115 = scmp.ne.s32.totalorder %s110, %s112
      %p116 = scmp.eq.s32.totalorder %s20, 0
      %p117 = por %p115, %p116
      %p118 = scmp.ne.s32.totalorder %s110, %s112
      %p119 = scmp.eq.s32.totalorder %s25, 1
      %p120 = por %p118, %p119
      %p121 = scmp.ne.s32.totalorder %s112, %s113
      %p122 = scmp.eq.s32.totalorder %s25, 0
      %p123 = por %p121, %p122
      %p124 = scmp.ne.s32.totalorder %s112, %s113
      %p125 = scmp.eq.s32.totalorder %s26, 1
      %p126 = por %p124, %p125
      %p128 = scmp.ne.s32.totalorder %s113, %s127
      %p129 = scmp.eq.s32.totalorder %s26, 0
      %p130 = por %p128, %p129
      %s131 = ssub.s32 %s27, %s39
      %s132 = ssub.s32 %s28, %s35
      %s133 = sor.u32 %s131, %s132
      %p134 = scmp.eq.s32.totalorder %s133, 0
      %s136 = sadd.s32 %s135, 1
      %s137 = scalar_select %p134, %s135, %s136
      %p140 = pneg %p134
      %p141 = scmp.eq.s32.totalorder %s20, 1
      %p142 = por %p140, %p141
      %p143 = scmp.ne.s32.totalorder %s135, %s138
      %p144 = scmp.eq.s32.totalorder %s20, 0
      %p145 = por %p143, %p144
      %p146 = scmp.ne.s32.totalorder %s135, %s138
      %p147 = scmp.eq.s32.totalorder %s25, 1
      %p148 = por %p146, %p147
      %p149 = scmp.ne.s32.totalorder %s138, %s139
      %p150 = scmp.eq.s32.totalorder %s25, 0
      %p151 = por %p149, %p150
      %p152 = scmp.ne.s32.totalorder %s138, %s139
      %p153 = scmp.eq.s32.totalorder %s26, 1
      %p154 = por %p152, %p153
      %p156 = scmp.ne.s32.totalorder %s139, %s155
      %p157 = scmp.eq.s32.totalorder %s26, 0
      %p158 = por %p156, %p157
      %s159 = ssub.s32 %s27, %s39
      %s160 = ssub.s32 %s28, %s35
      %s161 = sor.u32 %s159, %s160
      %p162 = scmp.eq.s32.totalorder %s161, 0
      %s164 = sadd.s32 %s163, 1
      %s165 = scalar_select %p162, %s163, %s164
      %p168 = pneg %p162
      %p169 = scmp.eq.s32.totalorder %s20, 1
      %p170 = por %p168, %p169
      %p171 = scmp.ne.s32.totalorder %s163, %s166
      %p172 = scmp.eq.s32.totalorder %s20, 0
      %p173 = por %p171, %p172
      %p174 = scmp.ne.s32.totalorder %s163, %s166
      %p175 = scmp.eq.s32.totalorder %s25, 1
      %p176 = por %p174, %p175
      %p177 = scmp.ne.s32.totalorder %s166, %s167
      %p178 = scmp.eq.s32.totalorder %s25, 0
      %p179 = por %p177, %p178
      %p180 = scmp.ne.s32.totalorder %s166, %s167
      %p181 = scmp.eq.s32.totalorder %s26, 1
      %p182 = por %p180, %p181
      %p184 = scmp.ne.s32.totalorder %s167, %s183
      %p185 = scmp.eq.s32.totalorder %s26, 0
      %p186 = por %p184, %p185
      %s187 = ssub.s32 %s27, %s39
      %s188 = ssub.s32 %s28, %s35
      %s189 = sor.u32 %s187, %s188
      %p190 = scmp.eq.s32.totalorder %s189, 0
      %s192 = sadd.s32 %s191, 1
      %s193 = scalar_select %p190, %s191, %s192
      %p196 = pneg %p190
      %p197 = scmp.eq.s32.totalorder %s20, 1
      %p198 = por %p196, %p197
      %p199 = scmp.ne.s32.totalorder %s191, %s194
      %p200 = scmp.eq.s32.totalorder %s20, 0
      %p201 = por %p199, %p200
      %p202 = scmp.ne.s32.totalorder %s191, %s194
      %p203 = scmp.eq.s32.totalorder %s25, 1
      %p204 = por %p202, %p203
      %p205 = scmp.ne.s32.totalorder %s194, %s195
      %p206 = scmp.eq.s32.totalorder %s25, 0
      %p207 = por %p205, %p206
      %p208 = scmp.ne.s32.totalorder %s194, %s195
      %p209 = scmp.eq.s32.totalorder %s26, 1
      %p210 = por %p208, %p209
      %p212 = scmp.ne.s32.totalorder %s195, %s211
      %p213 = scmp.eq.s32.totalorder %s26, 0
      %p214 = por %p212, %p213
      %s215 = ssub.s32 %s27, %s39
      %s216 = ssub.s32 %s28, %s35
      %s217 = sor.u32 %s215, %s216
      %p218 = scmp.eq.s32.totalorder %s217, 0
      %s220 = sadd.s32 %s219, 1
      %s221 = scalar_select %p218, %s219, %s220
      %p224 = pneg %p218
      %p225 = scmp.eq.s32.totalorder %s20, 1
      %p226 = por %p224, %p225
      %p227 = scmp.ne.s32.totalorder %s219, %s222
      %p228 = scmp.eq.s32.totalorder %s20, 0
      %p229 = por %p227, %p228
      %p230 = scmp.ne.s32.totalorder %s219, %s222
      %p231 = scmp.eq.s32.totalorder %s25, 1
      %p232 = por %p230, %p231
      %p233 = scmp.ne.s32.totalorder %s222, %s223
      %p234 = scmp.eq.s32.totalorder %s25, 0
      %p235 = por %p233, %p234
      %p236 = scmp.ne.s32.totalorder %s222, %s223
      %p237 = scmp.eq.s32.totalorder %s26, 1
      %p238 = por %p236, %p237
      %p240 = scmp.ne.s32.totalorder %s223, %s239
      %p241 = scmp.eq.s32.totalorder %s26, 0
      %p242 = por %p240, %p241
      %p243 = scmp.le.s32.totalorder 1, %s20
      %p244 = scmp.lt.s32.totalorder %s20, 3
      %p245 = pnand %p243, %p244
      %p246 = pneg %p245
      // Predicated region
      $region9: #{tpu_custom_call.1} parent=5 // pred_check
        _
      $region10: #{tpu_custom_call.1} parent=5 // pred_check_branch
        %248 = sbr.rel (%p245) target = $region12
      $region11: #{tpu_custom_call.1} parent=5 // pred_region
        %s249 = ssub.s32 %s20, 1
        // Predicated region
        $region13: #{tpu_custom_call.1} parent=11 // pred_check
          %p250 = pneg %p81
        $region14: #{tpu_custom_call.1} parent=11 // pred_check_branch
          %252 = sbr.rel (%p250) target = $region16
        $region15: #{tpu_custom_call.1} parent=11 // pred_region
          _
        $region16: #{tpu_custom_call.1} parent=11 // pred_fallthru
          _
        // Predicated region
        $region17: #{tpu_custom_call.1} parent=11 // pred_check
          %p253 = pneg %p102
        $region18: #{tpu_custom_call.1} parent=11 // pred_check_branch
          %255 = sbr.rel (%p253) target = $region20
        $region19: #{tpu_custom_call.1} parent=11 // pred_region
          _
        $region20: #{tpu_custom_call.1} parent=11 // pred_fallthru
          _
        // Predicated region
        $region21: #{tpu_custom_call.1} parent=11 // pred_check
          %p256 = pneg %p123
        $region22: #{tpu_custom_call.1} parent=11 // pred_check_branch
          %258 = sbr.rel (%p256) target = $region24
        $region23: #{tpu_custom_call.1} parent=11 // pred_region
          _
        $region24: #{tpu_custom_call.1} parent=11 // pred_fallthru
          _
      $region12: #{tpu_custom_call.1} parent=5 // pred_fallthru
        _
      %p259 = scmp.lt.s32.totalorder %s20, 2
      // Predicated region
      $region25: #{tpu_custom_call.1} parent=5 // pred_check
        %p260 = pneg %p259
      $region26: #{tpu_custom_call.1} parent=5 // pred_check_branch
        %262 = sbr.rel (%p260) target = $region28
      $region27: #{tpu_custom_call.1} parent=5 // pred_region
        // Predicated region
        $region29: #{tpu_custom_call.1} parent=27 // pred_check
          %p263 = pneg %p54
        $region30: #{tpu_custom_call.1} parent=27 // pred_check_branch
          %265 = sbr.rel (%p263) target = $region32
        $region31: #{tpu_custom_call.1} parent=27 // pred_region
          %s266 = smul.u32 2, %s28
          %p267 = scmp.lt.s32.totalorder %s27, 1
          %s268 = scalar_select %p267, %s27, 1
          %p269 = scmp.lt.s32.totalorder %s266, 1
          %s270 = scalar_select %p269, %s266, 1
          %s271 = smul.addr %s268, 2
          %s272 = sadd.s32 %s270, %s271
          %s273 = smul.addr %s272, 4
          %s274 = scalar_lea.vmem %s0, %s273
          %s275 = smul.u32 2, %s28
        $region32: #{tpu_custom_call.1} parent=27 // pred_fallthru
          _
      $region28: #{tpu_custom_call.1} parent=5 // pred_fallthru
        _
      %p276 = scmp.le.s32.totalorder 1, %s20
      %p277 = scmp.lt.s32.totalorder %s20, 3
      %p278 = pnand %p276, %p277
      %p279 = pneg %p278
      // Predicated region
      $region33: #{tpu_custom_call.1} parent=5 // pred_check
        _
      $region34: #{tpu_custom_call.1} parent=5 // pred_check_branch
        %281 = sbr.rel (%p278) target = $region36
      $region35: #{tpu_custom_call.1} parent=5 // pred_region
        %s282 = ssub.s32 %s20, 1
        %s283 = smul.u32 2, %s30
        %p284 = scmp.lt.s32.totalorder %s29, 1
        %s285 = scalar_select %p284, %s29, 1
        %p286 = scmp.lt.s32.totalorder %s283, 1
        %s287 = scalar_select %p286, %s283, 1
        %s288 = smul.addr %s285, 2
        %s289 = sadd.s32 %s287, %s288
        %s290 = smul.addr %s289, 4
        %s291 = scalar_lea.vmem %s0, %s290
        %p292 = pneg %p60
        %p293 = pneg %p57
        %p294 = pneg %p81
        %p295 = pneg %p78
        %p296 = pneg %p102
        %p297 = pneg %p99
        %p298 = pneg %p123
        %p299 = pneg %p120
        %p300 = pneg %p151
        %p301 = pneg %p148
        %s302 = sand.u32 %s138, 1
        %s303 = scalar_lea.sflag [#allocation3], %s302
        %s304 = sand.u32 %s138, 1
        %s305 = smul.addr %s304, 8
        %s306 = scalar_lea.vmem [#allocation2], %s305
        %p307 = pneg %p179
        %p308 = pneg %p176
        %s309 = sand.u32 %s25, 1
        %s310 = scalar_lea.sflag [#allocation5], %s309
        %s311 = sand.u32 %s166, 1
        %s312 = smul.addr %s311, 2
        %s313 = scalar_lea.vmem [#allocation4], %s312
        %p314 = pneg %p207
        %p315 = pneg %p204
        %s316 = sand.u32 %s25, 1
        %s317 = scalar_lea.sflag [#allocation5], %s316
        %s318 = sand.u32 %s194, 1
        %s319 = scalar_lea.vmem [#allocation6], %s318
        %p320 = pneg %p235
        %p321 = pneg %p232
        %p322 = scmp.lt.s32.totalorder %s29, 1
        %s323 = scalar_select %p322, %s29, 1
        %p324 = scmp.lt.s32.totalorder %s30, 0
        %s325 = scalar_select %p324, %s30, 0
        %s326 = smul.addr %s325, 2
        %s327 = smul.addr %s323, 2
        %s328 = sadd.s32 %s326, %s327
        %s329 = smul.addr %s328, 8
        %s330 = scalar_lea.vmem %s7, %s329
        %s331 = smul.u32 2, %s30
        %p332 = scmp.lt.s32.totalorder %s29, 1
        %s333 = scalar_select %p332, %s29, 1
        %p334 = scmp.lt.s32.totalorder %s331, 1
        %s335 = scalar_select %p334, %s331, 1
        %s336 = smul.addr %s333, 2
        %s337 = sadd.s32 %s335, %s336
        %s338 = smul.addr %s337, 4
        %s339 = scalar_lea.vmem %s0, %s338
        %s340 = smul.u32 2, %s30
        %s341 = smul.u32 2, %s30
        %s342 = smul.u32 2, %s30
        %p343 = scmp.lt.s32.totalorder %s29, 1
        %s344 = scalar_select %p343, %s29, 1
        %p345 = scmp.lt.s32.totalorder %s30, 0
        %s346 = scalar_select %p345, %s30, 0
        %s347 = smul.addr %s346, 2
        %s348 = smul.addr %s344, 2
        %s349 = sadd.s32 %s347, %s348
        %s350 = smul.addr %s349, 8
        %s351 = scalar_lea.vmem %s7, %s350
        %v352 = vld [vmem:[%s339] sm:$0xff]
        %v353 = vld [vmem:[%s1] sm:$0xff]
        %v354 = vld [vmem:[%s1 + $0x8] sm:$0xff]
        %v355 = vld [vmem:[%s2] sm:$0xf]
        %v356 = vld [vmem:[%s3] sm:$0xff]
        %v357 = vld [vmem:[%s3 + $0x8] sm:$0xff]
        %v359 = vcombine.high %v352, %v352
        %vm360 = vcmask 31744
        %v362 = vsel %vm360, %v353, 0
        %v365 = vsel %vm360, %v354, 0
        %vm367 = vcmask 1043456
        %v368 = vsel %vm367, %v352, 0
        %v370 = vsel %vm367, %v359, 0
        %v372 = vand.u32 %v370, 4294901760
        %373 = vmatprep.subr.mxu0 %v372
        %v374 = vand.u32 %v368, 4294901760
        %375 = vmatpush1.msra.mxu0 %v374
        %376 = vmatprep.subr.mxu0 0.0
        %377 = vmatpush1.msra.mxu0 0.0
        %378 = vmatprep.subr.mxu0 0.0
        %379 = vmatpush1.msra.mxu0 0.0
        %380 = vmatprep.subr.mxu0 0.0
        %381 = vmatpush1.msra.mxu0 0.0
        %382 = vmatprep.subr.mxu0 0.0
        %383 = vmatpush1.msra.mxu0 0.0
        %384 = vmatprep.subr.mxu0 0.0
        %385 = vmatpush1.msra.mxu0 0.0
        %386 = vmatprep.subr.mxu0 0.0
        %387 = vmatpush1.msra.mxu0 0.0
        %388 = vmatprep.subr.mxu0 0.0
        %389 = vmatpush1.msra.mxu0 0.0
        %390 = vmatprep.subr.mxu0 0.0
        %391 = vmatpush1.msra.mxu0 0.0
        %392 = vmatprep.subr.mxu0 0.0
        %393 = vmatpush1.msra.mxu0 0.0
        %394 = vmatprep.subr.mxu0 0.0
        %395 = vmatpush1.msra.mxu0 0.0
        %396 = vmatprep.subr.mxu0 0.0
        %397 = vmatpush1.msra.mxu0 0.0
        %398 = vmatprep.subr.mxu0 0.0
        %399 = vmatpush1.msra.mxu0 0.0
        %400 = vmatprep.subr.mxu0 0.0
        %401 = vmatpush1.msra.mxu0 0.0
        %402 = vmatprep.subr.mxu0 0.0
        %403 = vmatpush1.msra.mxu0 0.0
        %404 = vmatprep.subr.mxu0 0.0
        %405 = vmatpush1.msra.mxu0 0.0
        %406 = vmatprep.subr.mxu0 0.0
        %407 = vmatpush1.msra.mxu0 0.0
        %408 = vmatprep.subr.mxu0 0.0
        %409 = vmatpush1.msra.mxu0 0.0
        %410 = vmatprep.subr.mxu0 0.0
        %411 = vmatpush1.msra.mxu0 0.0
        %412 = vmatprep.subr.mxu0 0.0
        %413 = vmatpush1.msra.mxu0 0.0
        %414 = vmatprep.subr.mxu0 0.0
        %415 = vmatpush1.msra.mxu0 0.0
        %416 = vmatprep.subr.mxu0 0.0
        %417 = vmatpush1.msra.mxu0 0.0
        %418 = vmatprep.subr.mxu0 0.0
        %419 = vmatpush1.msra.mxu0 0.0
        %420 = vmatprep.subr.mxu0 0.0
        %421 = vmatpush1.msra.mxu0 0.0
        %422 = vmatprep.subr.mxu0 0.0
        %423 = vmatpush1.msra.mxu0 0.0
        %424 = vmatprep.subr.mxu0 0.0
        %425 = vmatpush1.msra.mxu0 0.0
        %426 = vmatprep.subr.mxu0 0.0
        %427 = vmatpush1.msra.mxu0 0.0
        %428 = vmatprep.subr.mxu0 0.0
        %429 = vmatpush1.msra.mxu0 0.0
        %430 = vmatprep.subr.mxu0 0.0
        %431 = vmatpush1.msra.mxu0 0.0
        %432 = vmatprep.subr.mxu0 0.0
        %433 = vmatpush1.msra.mxu0 0.0
        %434 = vmatprep.subr.mxu0 0.0
        %435 = vmatpush1.msra.mxu0 0.0
        %436 = vmatprep.subr.mxu0 0.0
        %437 = vmatpush1.msra.mxu0 0.0
        %438 = vmatprep.mubr.f32.mxu0 0.0
        %v439 = vand.u32 %v362, 4294901760
        %v440 = vsub.f32 %v362, %v439
        %v441 = vand.u32 %v440, 4294901760
        %v442 = vsub.f32 %v440, %v441
        %v443 = vand.u32 %v442, 4294901760
        %444 = vmatmul.mubr.f32.gmra.mrb[0].mxu0 %v443
        %v445 = vpop.f32.mrb[0].mxu0
        %v446 = vadd.f32 0.0, %v445
        %v447 = vpop.f32.mrb[0].mxu0
        %v448 = vadd.f32 0.0, %v447
        %449 = vmatprep.mubr.f32.mxu0 0.0
        %v450 = vand.u32 %v365, 4294901760
        %v451 = vsub.f32 %v365, %v450
        %v452 = vand.u32 %v451, 4294901760
        %v453 = vsub.f32 %v451, %v452
        %v454 = vand.u32 %v453, 4294901760
        %455 = vmatmul.mubr.f32.gmra.mrb[0].mxu0 %v454
        %v456 = vpop.f32.mrb[0].mxu0
        %v457 = vadd.f32 0.0, %v456
        %v458 = vpop.f32.mrb[0].mxu0
        %v459 = vadd.f32 0.0, %v458
        %460 = vdwg.mxu0
        %v461 = vand.u32 %v370, 4294901760
        %v462 = vsub.f32 %v370, %v461
        %v463 = vand.u32 %v462, 4294901760
        %v464 = vsub.f32 %v462, %v463
        %v465 = vand.u32 %v464, 4294901760
        %466 = vmatprep.subr.mxu0 %v465
        %v467 = vand.u32 %v368, 4294901760
        %v468 = vsub.f32 %v368, %v467
        %v469 = vand.u32 %v468, 4294901760
        %v470 = vsub.f32 %v468, %v469
        %v471 = vand.u32 %v470, 4294901760
        %472 = vmatpush1.msra.mxu0 %v471
        %473 = vmatprep.subr.mxu0 0.0
        %474 = vmatpush1.msra.mxu0 0.0
        %475 = vmatprep.subr.mxu0 0.0
        %476 = vmatpush1.msra.mxu0 0.0
        %477 = vmatprep.subr.mxu0 0.0
        %478 = vmatpush1.msra.mxu0 0.0
        %479 = vmatprep.subr.mxu0 0.0
        %480 = vmatpush1.msra.mxu0 0.0
        %481 = vmatprep.subr.mxu0 0.0
        %482 = vmatpush1.msra.mxu0 0.0
        %483 = vmatprep.subr.mxu0 0.0
        %484 = vmatpush1.msra.mxu0 0.0
        %485 = vmatprep.subr.mxu0 0.0
        %486 = vmatpush1.msra.mxu0 0.0
        %487 = vmatprep.subr.mxu0 0.0
        %488 = vmatpush1.msra.mxu0 0.0
        %489 = vmatprep.subr.mxu0 0.0
        %490 = vmatpush1.msra.mxu0 0.0
        %491 = vmatprep.subr.mxu0 0.0
        %492 = vmatpush1.msra.mxu0 0.0
        %493 = vmatprep.subr.mxu0 0.0
        %494 = vmatpush1.msra.mxu0 0.0
        %495 = vmatprep.subr.mxu0 0.0
        %496 = vmatpush1.msra.mxu0 0.0
        %497 = vmatprep.subr.mxu0 0.0
        %498 = vmatpush1.msra.mxu0 0.0
        %499 = vmatprep.subr.mxu0 0.0
        %500 = vmatpush1.msra.mxu0 0.0
        %501 = vmatprep.subr.mxu0 0.0
        %502 = vmatpush1.msra.mxu0 0.0
        %503 = vmatprep.subr.mxu0 0.0
        %504 = vmatpush1.msra.mxu0 0.0
        %505 = vmatprep.subr.mxu0 0.0
        %506 = vmatpush1.msra.mxu0 0.0
        %507 = vmatprep.subr.mxu0 0.0
        %508 = vmatpush1.msra.mxu0 0.0
        %509 = vmatprep.subr.mxu0 0.0
        %510 = vmatpush1.msra.mxu0 0.0
        %511 = vmatprep.subr.mxu0 0.0
        %512 = vmatpush1.msra.mxu0 0.0
        %513 = vmatprep.subr.mxu0 0.0
        %514 = vmatpush1.msra.mxu0 0.0
        %515 = vmatprep.subr.mxu0 0.0
        %516 = vmatpush1.msra.mxu0 0.0
        %517 = vmatprep.subr.mxu0 0.0
        %518 = vmatpush1.msra.mxu0 0.0
        %519 = vmatprep.subr.mxu0 0.0
        %520 = vmatpush1.msra.mxu0 0.0
        %521 = vmatprep.subr.mxu0 0.0
        %522 = vmatpush1.msra.mxu0 0.0
        %523 = vmatprep.subr.mxu0 0.0
        %524 = vmatpush1.msra.mxu0 0.0
        %525 = vmatprep.subr.mxu0 0.0
        %526 = vmatpush1.msra.mxu0 0.0
        %527 = vmatprep.subr.mxu0 0.0
        %528 = vmatpush1.msra.mxu0 0.0
        %529 = vmatprep.subr.mxu0 0.0
        %530 = vmatpush1.msra.mxu0 0.0
        %531 = vmatprep.subr.mxu0 0.0
        %532 = vmatpush1.msra.mxu0 0.0
        %533 = vmatprep.subr.mxu0 0.0
        %534 = vmatpush1.msra.mxu0 0.0
        %535 = vmatprep.mubr.f32.mxu0 0.0
        %v536 = vand.u32 %v362, 4294901760
        %537 = vmatmul.mubr.f32.gmra.mrb[0].mxu0 %v536
        %v538 = vpop.f32.mrb[0].mxu0
        %v539 = vadd.f32 %v446, %v538
        %v540 = vpop.f32.mrb[0].mxu0
        %v541 = vadd.f32 %v448, %v540
        %542 = vmatprep.mubr.f32.mxu0 0.0
        %v543 = vand.u32 %v365, 4294901760
        %544 = vmatmul.mubr.f32.gmra.mrb[0].mxu0 %v543
        %v545 = vpop.f32.mrb[0].mxu0
        %v546 = vadd.f32 %v457, %v545
        %v547 = vpop.f32.mrb[0].mxu0
        %v548 = vadd.f32 %v459, %v547
        %549 = vdwg.mxu0
        %v550 = vand.u32 %v370, 4294901760
        %v551 = vsub.f32 %v370, %v550
        %552 = vmatprep.subr.mxu0 %v551
        %v553 = vand.u32 %v368, 4294901760
        %v554 = vsub.f32 %v368, %v553
        %555 = vmatpush1.msra.mxu0 %v554
        %556 = vmatprep.subr.mxu0 0.0
        %557 = vmatpush1.msra.mxu0 0.0
        %558 = vmatprep.subr.mxu0 0.0
        %559 = vmatpush1.msra.mxu0 0.0
        %560 = vmatprep.subr.mxu0 0.0
        %561 = vmatpush1.msra.mxu0 0.0
        %562 = vmatprep.subr.mxu0 0.0
        %563 = vmatpush1.msra.mxu0 0.0
        %564 = vmatprep.subr.mxu0 0.0
        %565 = vmatpush1.msra.mxu0 0.0
        %566 = vmatprep.subr.mxu0 0.0
        %567 = vmatpush1.msra.mxu0 0.0
        %568 = vmatprep.subr.mxu0 0.0
        %569 = vmatpush1.msra.mxu0 0.0
        %570 = vmatprep.subr.mxu0 0.0
        %571 = vmatpush1.msra.mxu0 0.0
        %572 = vmatprep.subr.mxu0 0.0
        %573 = vmatpush1.msra.mxu0 0.0
        %574 = vmatprep.subr.mxu0 0.0
        %575 = vmatpush1.msra.mxu0 0.0
        %576 = vmatprep.subr.mxu0 0.0
        %577 = vmatpush1.msra.mxu0 0.0
        %578 = vmatprep.subr.mxu0 0.0
        %579 = vmatpush1.msra.mxu0 0.0
        %580 = vmatprep.subr.mxu0 0.0
        %581 = vmatpush1.msra.mxu0 0.0
        %582 = vmatprep.subr.mxu0 0.0
        %583 = vmatpush1.msra.mxu0 0.0
        %584 = vmatprep.subr.mxu0 0.0
        %585 = vmatpush1.msra.mxu0 0.0
        %586 = vmatprep.subr.mxu0 0.0
        %587 = vmatpush1.msra.mxu0 0.0
        %588 = vmatprep.subr.mxu0 0.0
        %589 = vmatpush1.msra.mxu0 0.0
        %590 = vmatprep.subr.mxu0 0.0
        %591 = vmatpush1.msra.mxu0 0.0
        %592 = vmatprep.subr.mxu0 0.0
        %593 = vmatpush1.msra.mxu0 0.0
        %594 = vmatprep.subr.mxu0 0.0
        %595 = vmatpush1.msra.mxu0 0.0
        %596 = vmatprep.subr.mxu0 0.0
        %597 = vmatpush1.msra.mxu0 0.0
        %598 = vmatprep.subr.mxu0 0.0
        %599 = vmatpush1.msra.mxu0 0.0
        %600 = vmatprep.subr.mxu0 0.0
        %601 = vmatpush1.msra.mxu0 0.0
        %602 = vmatprep.subr.mxu0 0.0
        %603 = vmatpush1.msra.mxu0 0.0
        %604 = vmatprep.subr.mxu0 0.0
        %605 = vmatpush1.msra.mxu0 0.0
        %606 = vmatprep.subr.mxu0 0.0
        %607 = vmatpush1.msra.mxu0 0.0
        %608 = vmatprep.subr.mxu0 0.0
        %609 = vmatpush1.msra.mxu0 0.0
        %610 = vmatprep.subr.mxu0 0.0
        %611 = vmatpush1.msra.mxu0 0.0
        %612 = vmatprep.subr.mxu0 0.0
        %613 = vmatpush1.msra.mxu0 0.0
        %614 = vmatprep.subr.mxu0 0.0
        %615 = vmatpush1.msra.mxu0 0.0
        %616 = vmatprep.subr.mxu0 0.0
        %617 = vmatpush1.msra.mxu0 0.0
        %618 = vmatprep.mubr.f32.mxu0 0.0
        %v619 = vand.u32 %v362, 4294901760
        %v620 = vsub.f32 %v362, %v619
        %621 = vmatmul.mubr.f32.gmra.mrb[0].mxu0 %v620
        %v622 = vpop.f32.mrb[0].mxu0
        %v623 = vadd.f32 %v539, %v622
        %v624 = vpop.f32.mrb[0].mxu0
        %v625 = vadd.f32 %v541, %v624
        %626 = vmatprep.mubr.f32.mxu0 0.0
        %v627 = vand.u32 %v365, 4294901760
        %v628 = vsub.f32 %v365, %v627
        %629 = vmatmul.mubr.f32.gmra.mrb[0].mxu0 %v628
        %v630 = vpop.f32.mrb[0].mxu0
        %v631 = vadd.f32 %v546, %v630
        %v632 = vpop.f32.mrb[0].mxu0
        %v633 = vadd.f32 %v548, %v632
        %634 = vdwg.mxu0
        %v635 = vand.u32 %v370, 4294901760
        %636 = vmatprep.subr.mxu0 %v635
        %v637 = vand.u32 %v368, 4294901760
        %638 = vmatpush1.msra.mxu0 %v637
        %639 = vmatprep.subr.mxu0 0.0
        %640 = vmatpush1.msra.mxu0 0.0
        %641 = vmatprep.subr.mxu0 0.0
        %642 = vmatpush1.msra.mxu0 0.0
        %643 = vmatprep.subr.mxu0 0.0
        %644 = vmatpush1.msra.mxu0 0.0
        %645 = vmatprep.subr.mxu0 0.0
        %646 = vmatpush1.msra.mxu0 0.0
        %647 = vmatprep.subr.mxu0 0.0
        %648 = vmatpush1.msra.mxu0 0.0
        %649 = vmatprep.subr.mxu0 0.0
        %650 = vmatpush1.msra.mxu0 0.0
        %651 = vmatprep.subr.mxu0 0.0
        %652 = vmatpush1.msra.mxu0 0.0
        %653 = vmatprep.subr.mxu0 0.0
        %654 = vmatpush1.msra.mxu0 0.0
        %655 = vmatprep.subr.mxu0 0.0
        %656 = vmatpush1.msra.mxu0 0.0
        %657 = vmatprep.subr.mxu0 0.0
        %658 = vmatpush1.msra.mxu0 0.0
        %659 = vmatprep.subr.mxu0 0.0
        %660 = vmatpush1.msra.mxu0 0.0
        %661 = vmatprep.subr.mxu0 0.0
        %662 = vmatpush1.msra.mxu0 0.0
        %663 = vmatprep.subr.mxu0 0.0
        %664 = vmatpush1.msra.mxu0 0.0
        %665 = vmatprep.subr.mxu0 0.0
        %666 = vmatpush1.msra.mxu0 0.0
        %667 = vmatprep.subr.mxu0 0.0
        %668 = vmatpush1.msra.mxu0 0.0
        %669 = vmatprep.subr.mxu0 0.0
        %670 = vmatpush1.msra.mxu0 0.0
        %671 = vmatprep.subr.mxu0 0.0
        %672 = vmatpush1.msra.mxu0 0.0
        %673 = vmatprep.subr.mxu0 0.0
        %674 = vmatpush1.msra.mxu0 0.0
        %675 = vmatprep.subr.mxu0 0.0
        %676 = vmatpush1.msra.mxu0 0.0
        %677 = vmatprep.subr.mxu0 0.0
        %678 = vmatpush1.msra.mxu0 0.0
        %679 = vmatprep.subr.mxu0 0.0
        %680 = vmatpush1.msra.mxu0 0.0
        %681 = vmatprep.subr.mxu0 0.0
        %682 = vmatpush1.msra.mxu0 0.0
        %683 = vmatprep.subr.mxu0 0.0
        %684 = vmatpush1.msra.mxu0 0.0
        %685 = vmatprep.subr.mxu0 0.0
        %686 = vmatpush1.msra.mxu0 0.0
        %687 = vmatprep.subr.mxu0 0.0
        %688 = vmatpush1.msra.mxu0 0.0
        %689 = vmatprep.subr.mxu0 0.0
        %690 = vmatpush1.msra.mxu0 0.0
        %691 = vmatprep.subr.mxu0 0.0
        %692 = vmatpush1.msra.mxu0 0.0
        %693 = vmatprep.subr.mxu0 0.0
        %694 = vmatpush1.msra.mxu0 0.0
        %695 = vmatprep.subr.mxu0 0.0
        %696 = vmatpush1.msra.mxu0 0.0
        %697 = vmatprep.subr.mxu0 0.0
        %698 = vmatpush1.msra.mxu0 0.0
        %699 = vmatprep.subr.mxu0 0.0
        %700 = vmatpush1.msra.mxu0 0.0
        %701 = vmatprep.mubr.f32.mxu0 0.0
        %v702 = vand.u32 %v362, 4294901760
        %v703 = vsub.f32 %v362, %v702
        %v704 = vand.u32 %v703, 4294901760
        %705 = vmatmul.mubr.f32.gmra.mrb[0].mxu0 %v704
        %v706 = vpop.f32.mrb[0].mxu0
        %v707 = vadd.f32 %v623, %v706
        %v708 = vpop.f32.mrb[0].mxu0
        %v709 = vadd.f32 %v625, %v708
        %710 = vmatprep.mubr.f32.mxu0 0.0
        %v711 = vand.u32 %v365, 4294901760
        %v712 = vsub.f32 %v365, %v711
        %v713 = vand.u32 %v712, 4294901760
        %714 = vmatmul.mubr.f32.gmra.mrb[0].mxu0 %v713
        %v715 = vpop.f32.mrb[0].mxu0
        %v716 = vadd.f32 %v631, %v715
        %v717 = vpop.f32.mrb[0].mxu0
        %v718 = vadd.f32 %v633, %v717
        %719 = vdwg.mxu0
        %v720 = vand.u32 %v370, 4294901760
        %v721 = vsub.f32 %v370, %v720
        %v722 = vand.u32 %v721, 4294901760
        %723 = vmatprep.subr.mxu0 %v722
        %v724 = vand.u32 %v368, 4294901760
        %v725 = vsub.f32 %v368, %v724
        %v726 = vand.u32 %v725, 4294901760
        %727 = vmatpush1.msra.mxu0 %v726
        %728 = vmatprep.subr.mxu0 0.0
        %729 = vmatpush1.msra.mxu0 0.0
        %730 = vmatprep.subr.mxu0 0.0
        %731 = vmatpush1.msra.mxu0 0.0
        %732 = vmatprep.subr.mxu0 0.0
        %733 = vmatpush1.msra.mxu0 0.0
        %734 = vmatprep.subr.mxu0 0.0
        %735 = vmatpush1.msra.mxu0 0.0
        %736 = vmatprep.subr.mxu0 0.0
        %737 = vmatpush1.msra.mxu0 0.0
        %738 = vmatprep.subr.mxu0 0.0
        %739 = vmatpush1.msra.mxu0 0.0
        %740 = vmatprep.subr.mxu0 0.0
        %741 = vmatpush1.msra.mxu0 0.0
        %742 = vmatprep.subr.mxu0 0.0
        %743 = vmatpush1.msra.mxu0 0.0
        %744 = vmatprep.subr.mxu0 0.0
        %745 = vmatpush1.msra.mxu0 0.0
        %746 = vmatprep.subr.mxu0 0.0
        %747 = vmatpush1.msra.mxu0 0.0
        %748 = vmatprep.subr.mxu0 0.0
        %749 = vmatpush1.msra.mxu0 0.0
        %750 = vmatprep.subr.mxu0 0.0
        %751 = vmatpush1.msra.mxu0 0.0
        %752 = vmatprep.subr.mxu0 0.0
        %753 = vmatpush1.msra.mxu0 0.0
        %754 = vmatprep.subr.mxu0 0.0
        %755 = vmatpush1.msra.mxu0 0.0
        %756 = vmatprep.subr.mxu0 0.0
        %757 = vmatpush1.msra.mxu0 0.0
        %758 = vmatprep.subr.mxu0 0.0
        %759 = vmatpush1.msra.mxu0 0.0
        %760 = vmatprep.subr.mxu0 0.0
        %761 = vmatpush1.msra.mxu0 0.0
        %762 = vmatprep.subr.mxu0 0.0
        %763 = vmatpush1.msra.mxu0 0.0
        %764 = vmatprep.subr.mxu0 0.0
        %765 = vmatpush1.msra.mxu0 0.0
        %766 = vmatprep.subr.mxu0 0.0
        %767 = vmatpush1.msra.mxu0 0.0
        %768 = vmatprep.subr.mxu0 0.0
        %769 = vmatpush1.msra.mxu0 0.0
        %770 = vmatprep.subr.mxu0 0.0
        %771 = vmatpush1.msra.mxu0 0.0
        %772 = vmatprep.subr.mxu0 0.0
        %773 = vmatpush1.msra.mxu0 0.0
        %774 = vmatprep.subr.mxu0 0.0
        %775 = vmatpush1.msra.mxu0 0.0
        %776 = vmatprep.subr.mxu0 0.0
        %777 = vmatpush1.msra.mxu0 0.0
        %778 = vmatprep.subr.mxu0 0.0
        %779 = vmatpush1.msra.mxu0 0.0
        %780 = vmatprep.subr.mxu0 0.0
        %781 = vmatpush1.msra.mxu0 0.0
        %782 = vmatprep.subr.mxu0 0.0
        %783 = vmatpush1.msra.mxu0 0.0
        %784 = vmatprep.subr.mxu0 0.0
        %785 = vmatpush1.msra.mxu0 0.0
        %786 = vmatprep.subr.mxu0 0.0
        %787 = vmatpush1.msra.mxu0 0.0
        %788 = vmatprep.subr.mxu0 0.0
        %789 = vmatpush1.msra.mxu0 0.0
        %790 = vmatprep.mubr.f32.mxu0 0.0
        %v791 = vand.u32 %v362, 4294901760
        %792 = vmatmul.mubr.f32.gmra.mrb[0].mxu0 %v791
        %v793 = vpop.f32.mrb[0].mxu0
        %v794 = vadd.f32 %v707, %v793
        %v795 = vpop.f32.mrb[0].mxu0
        %v796 = vadd.f32 %v709, %v795
        %797 = vmatprep.mubr.f32.mxu0 0.0
        %v798 = vand.u32 %v365, 4294901760
        %799 = vmatmul.mubr.f32.gmra.mrb[0].mxu0 %v798
        %v800 = vpop.f32.mrb[0].mxu0
        %v801 = vadd.f32 %v716, %v800
        %v802 = vpop.f32.mrb[0].mxu0
        %v803 = vadd.f32 %v718, %v802
        %804 = vdwg.mxu0
        %v805 = vand.u32 %v370, 4294901760
        %806 = vmatprep.subr.mxu0 %v805
        %v807 = vand.u32 %v368, 4294901760
        %808 = vmatpush1.msra.mxu0 %v807
        %809 = vmatprep.subr.mxu0 0.0
        %810 = vmatpush1.msra.mxu0 0.0
        %811 = vmatprep.subr.mxu0 0.0
        %812 = vmatpush1.msra.mxu0 0.0
        %813 = vmatprep.subr.mxu0 0.0
        %814 = vmatpush1.msra.mxu0 0.0
        %815 = vmatprep.subr.mxu0 0.0
        %816 = vmatpush1.msra.mxu0 0.0
        %817 = vmatprep.subr.mxu0 0.0
        %818 = vmatpush1.msra.mxu0 0.0
        %819 = vmatprep.subr.mxu0 0.0
        %820 = vmatpush1.msra.mxu0 0.0
        %821 = vmatprep.subr.mxu0 0.0
        %822 = vmatpush1.msra.mxu0 0.0
        %823 = vmatprep.subr.mxu0 0.0
        %824 = vmatpush1.msra.mxu0 0.0
        %825 = vmatprep.subr.mxu0 0.0
        %826 = vmatpush1.msra.mxu0 0.0
        %827 = vmatprep.subr.mxu0 0.0
        %828 = vmatpush1.msra.mxu0 0.0
        %829 = vmatprep.subr.mxu0 0.0
        %830 = vmatpush1.msra.mxu0 0.0
        %831 = vmatprep.subr.mxu0 0.0
        %832 = vmatpush1.msra.mxu0 0.0
        %833 = vmatprep.subr.mxu0 0.0
        %834 = vmatpush1.msra.mxu0 0.0
        %835 = vmatprep.subr.mxu0 0.0
        %836 = vmatpush1.msra.mxu0 0.0
        %837 = vmatprep.subr.mxu0 0.0
        %838 = vmatpush1.msra.mxu0 0.0
        %839 = vmatprep.subr.mxu0 0.0
        %840 = vmatpush1.msra.mxu0 0.0
        %841 = vmatprep.subr.mxu0 0.0
        %842 = vmatpush1.msra.mxu0 0.0
        %843 = vmatprep.subr.mxu0 0.0
        %844 = vmatpush1.msra.mxu0 0.0
        %845 = vmatprep.subr.mxu0 0.0
        %846 = vmatpush1.msra.mxu0 0.0
        %847 = vmatprep.subr.mxu0 0.0
        %848 = vmatpush1.msra.mxu0 0.0
        %849 = vmatprep.subr.mxu0 0.0
        %850 = vmatpush1.msra.mxu0 0.0
        %851 = vmatprep.subr.mxu0 0.0
        %852 = vmatpush1.msra.mxu0 0.0
        %853 = vmatprep.subr.mxu0 0.0
        %854 = vmatpush1.msra.mxu0 0.0
        %855 = vmatprep.subr.mxu0 0.0
        %856 = vmatpush1.msra.mxu0 0.0
        %857 = vmatprep.subr.mxu0 0.0
        %858 = vmatpush1.msra.mxu0 0.0
        %859 = vmatprep.subr.mxu0 0.0
        %860 = vmatpush1.msra.mxu0 0.0
        %861 = vmatprep.subr.mxu0 0.0
        %862 = vmatpush1.msra.mxu0 0.0
        %863 = vmatprep.subr.mxu0 0.0
        %864 = vmatpush1.msra.mxu0 0.0
        %865 = vmatprep.subr.mxu0 0.0
        %866 = vmatpush1.msra.mxu0 0.0
        %867 = vmatprep.subr.mxu0 0.0
        %868 = vmatpush1.msra.mxu0 0.0
        %869 = vmatprep.subr.mxu0 0.0
        %870 = vmatpush1.msra.mxu0 0.0
        %871 = vmatprep.mubr.f32.mxu0 0.0
        %v872 = vand.u32 %v362, 4294901760
        %873 = vmatmul.mubr.f32.gmra.mrb[0].mxu0 %v872
        %v874 = vpop.f32.mrb[0].mxu0
        %v875 = vadd.f32 %v794, %v874
        %v876 = vpop.f32.mrb[0].mxu0
        %v877 = vadd.f32 %v796, %v876
        %878 = vmatprep.mubr.f32.mxu0 0.0
        %v879 = vand.u32 %v365, 4294901760
        %880 = vmatmul.mubr.f32.gmra.mrb[0].mxu0 %v879
        %v881 = vpop.f32.mrb[0].mxu0
        %v882 = vadd.f32 %v801, %v881
        %v883 = vpop.f32.mrb[0].mxu0
        %v884 = vadd.f32 %v803, %v883
        %885 = vdwg.mxu0
        %887 = vset.pattern.permute.xlu0 0
        %888 = vperm.xlu0 %887, %v356
        %v889 = vpop.permute.xlu0 %888
        %892 = vset.pattern.permute.xlu0 0
        %893 = vperm.xlu0 %892, %v357
        %v894 = vpop.permute.xlu0 %893
        %v896 = vadd.f32 %v889, %v875
        %v897 = vadd.f32 %v889, %v877
        %v898 = vadd.f32 %v894, %v882
        %v899 = vadd.f32 %v894, %v884
        %v900 = vlaneseq
        %v901 = vshrl.u32 %v900, 7
        %v902 = vadd.s32 %v901, 8
        %v903 = vmin.f32 %v896, %v898
        %v904 = vrot.slane %v903, 4
        %v905 = vmin.f32 %v903, %v904
        %v906 = vrot.slane %v905, 2
        %v907 = vmin.f32 %v905, %v906
        %v908 = vrot.slane %v907, 1
        %v909 = vmin.f32 %v907, %v908
        %v910 = vmin.f32 %v897, %v899
        %v911 = vrot.slane %v910, 4
        %v912 = vmin.f32 %v910, %v911
        %v913 = vrot.slane %v912, 2
        %v914 = vmin.f32 %v912, %v913
        %v915 = vrot.slane %v914, 1
        %v916 = vmin.f32 %v914, %v915
        %vm917 = vcmp.eq.f32.partialorder %v896, %v909
        %vm918 = vcmp.eq.f32.partialorder %v897, %v916
        %vm919 = vcmp.eq.f32.partialorder %v898, %v909
        %vm920 = vcmp.eq.f32.partialorder %v899, %v916
        %v921 = vsel %vm917, %v901, 16
        %v922 = vsel %vm918, %v901, 16
        %v923 = vsel %vm919, %v902, 16
        %v924 = vsel %vm920, %v902, 16
        %vm925 = vcmp.lt.s32.totalorder %v921, %v923
        %v926 = vsel %vm925, %v921, %v923
        %v927 = vrot.slane %v926, 4
        %vm928 = vcmp.lt.s32.totalorder %v926, %v927
        %v929 = vsel %vm928, %v926, %v927
        %v930 = vrot.slane %v929, 2
        %vm931 = vcmp.lt.s32.totalorder %v929, %v930
        %v932 = vsel %vm931, %v929, %v930
        %v933 = vrot.slane %v932, 1
        %vm934 = vcmp.lt.s32.totalorder %v932, %v933
        %v935 = vsel %vm934, %v932, %v933
        %vm936 = vcmp.lt.s32.totalorder %v922, %v924
        %v937 = vsel %vm936, %v922, %v924
        %v938 = vrot.slane %v937, 4
        %vm939 = vcmp.lt.s32.totalorder %v937, %v938
        %v940 = vsel %vm939, %v937, %v938
        %v941 = vrot.slane %v940, 2
        %vm942 = vcmp.lt.s32.totalorder %v940, %v941
        %v943 = vsel %vm942, %v940, %v941
        %v944 = vrot.slane %v943, 1
        %vm945 = vcmp.lt.s32.totalorder %v943, %v944
        %v946 = vsel %vm945, %v943, %v944
        %vm947 = vcmp.eq.s32.totalorder %v901, %v935
        %vm948 = vcmp.eq.s32.totalorder %v901, %v946
        %vm949 = vcmp.eq.s32.totalorder %v902, %v935
        %vm950 = vcmp.eq.s32.totalorder %v902, %v946
        %v951 = vsel %vm947, 1, 0
        %v952 = vsel %vm948, 1, 0
        %v953 = vsel %vm949, 1, 0
        %v954 = vsel %vm950, 1, 0
        %v955 = vcvt.s32.f32 %v951
        %v956 = vcvt.s32.f32 %v952
        %v957 = vcvt.s32.f32 %v953
        %v958 = vcvt.s32.f32 %v954
        %vm959 = vcmask 130048
        %v961 = vsel %vm959, %v355, 0
        %v963 = vand.u32 %v956, 4294901760
        %964 = vmatprep.subr.mxu0 %v963
        %v965 = vand.u32 %v955, 4294901760
        %966 = vmatpush1.msra.mxu0 %v965
        %v967 = vand.u32 %v958, 4294901760
        %968 = vmatprep.subr.mxu0 %v967
        %v969 = vand.u32 %v957, 4294901760
        %970 = vmatpush1.msra.mxu0 %v969
        %971 = vmatprep.subr.mxu0 0.0
        %972 = vmatpush1.msra.mxu0 0.0
        %973 = vmatprep.subr.mxu0 0.0
        %974 = vmatpush1.msra.mxu0 0.0
        %975 = vmatprep.subr.mxu0 0.0
        %976 = vmatpush1.msra.mxu0 0.0
        %977 = vmatprep.subr.mxu0 0.0
        %978 = vmatpush1.msra.mxu0 0.0
        %979 = vmatprep.subr.mxu0 0.0
        %980 = vmatpush1.msra.mxu0 0.0
        %981 = vmatprep.subr.mxu0 0.0
        %982 = vmatpush1.msra.mxu0 0.0
        %983 = vmatprep.subr.mxu0 0.0
        %984 = vmatpush1.msra.mxu0 0.0
        %985 = vmatprep.subr.mxu0 0.0
        %986 = vmatpush1.msra.mxu0 0.0
        %987 = vmatprep.subr.mxu0 0.0
        %988 = vmatpush1.msra.mxu0 0.0
        %989 = vmatprep.subr.mxu0 0.0
        %990 = vmatpush1.msra.mxu0 0.0
        %991 = vmatprep.subr.mxu0 0.0
        %992 = vmatpush1.msra.mxu0 0.0
        %993 = vmatprep.subr.mxu0 0.0
        %994 = vmatpush1.msra.mxu0 0.0
        %995 = vmatprep.subr.mxu0 0.0
        %996 = vmatpush1.msra.mxu0 0.0
        %997 = vmatprep.subr.mxu0 0.0
        %998 = vmatpush1.msra.mxu0 0.0
        %999 = vmatprep.subr.mxu0 0.0
        %1000 = vmatpush1.msra.mxu0 0.0
        %1001 = vmatprep.subr.mxu0 0.0
        %1002 = vmatpush1.msra.mxu0 0.0
        %1003 = vmatprep.subr.mxu0 0.0
        %1004 = vmatpush1.msra.mxu0 0.0
        %1005 = vmatprep.subr.mxu0 0.0
        %1006 = vmatpush1.msra.mxu0 0.0
        %1007 = vmatprep.subr.mxu0 0.0
        %1008 = vmatpush1.msra.mxu0 0.0
        %1009 = vmatprep.subr.mxu0 0.0
        %1010 = vmatpush1.msra.mxu0 0.0
        %1011 = vmatprep.subr.mxu0 0.0
        %1012 = vmatpush1.msra.mxu0 0.0
        %1013 = vmatprep.subr.mxu0 0.0
        %1014 = vmatpush1.msra.mxu0 0.0
        %1015 = vmatprep.subr.mxu0 0.0
        %1016 = vmatpush1.msra.mxu0 0.0
        %1017 = vmatprep.subr.mxu0 0.0
        %1018 = vmatpush1.msra.mxu0 0.0
        %1019 = vmatprep.subr.mxu0 0.0
        %1020 = vmatpush1.msra.mxu0 0.0
        %1021 = vmatprep.subr.mxu0 0.0
        %1022 = vmatpush1.msra.mxu0 0.0
        %1023 = vmatprep.subr.mxu0 0.0
        %1024 = vmatpush1.msra.mxu0 0.0
        %1025 = vmatprep.subr.mxu0 0.0
        %1026 = vmatpush1.msra.mxu0 0.0
        %1027 = vmatprep.subr.mxu0 0.0
        %1028 = vmatpush1.msra.mxu0 0.0
        %1029 = vmatprep.subr.mxu0 0.0
        %1030 = vmatpush1.msra.mxu0 0.0
        %1031 = vmatprep.mubr.f32.mxu0 0.0
        %v1032 = vand.u32 %v961, 4294901760
        %v1033 = vsub.f32 %v961, %v1032
        %v1034 = vand.u32 %v1033, 4294901760
        %v1035 = vsub.f32 %v1033, %v1034
        %v1036 = vand.u32 %v1035, 4294901760
        %1037 = vmatmul.mubr.f32.gmra.mrb[0].mxu0 %v1036
        %v1038 = vpop.f32.mrb[0].mxu0
        %v1039 = vadd.f32 0.0, %v1038
        %v1040 = vpop.f32.mrb[0].mxu0
        %v1041 = vadd.f32 0.0, %v1040
        %1042 = vdwg.mxu0
        %v1043 = vand.u32 %v956, 4294901760
        %v1044 = vsub.f32 %v956, %v1043
        %v1045 = vand.u32 %v1044, 4294901760
        %v1046 = vsub.f32 %v1044, %v1045
        %v1047 = vand.u32 %v1046, 4294901760
        %1048 = vmatprep.subr.mxu0 %v1047
        %v1049 = vand.u32 %v955, 4294901760
        %v1050 = vsub.f32 %v955, %v1049
        %v1051 = vand.u32 %v1050, 4294901760
        %v1052 = vsub.f32 %v1050, %v1051
        %v1053 = vand.u32 %v1052, 4294901760
        %1054 = vmatpush1.msra.mxu0 %v1053
        %v1055 = vand.u32 %v958, 4294901760
        %v1056 = vsub.f32 %v958, %v1055
        %v1057 = vand.u32 %v1056, 4294901760
        %v1058 = vsub.f32 %v1056, %v1057
        %v1059 = vand.u32 %v1058, 4294901760
        %1060 = vmatprep.subr.mxu0 %v1059
        %v1061 = vand.u32 %v957, 4294901760
        %v1062 = vsub.f32 %v957, %v1061
        %v1063 = vand.u32 %v1062, 4294901760
        %v1064 = vsub.f32 %v1062, %v1063
        %v1065 = vand.u32 %v1064, 4294901760
        %1066 = vmatpush1.msra.mxu0 %v1065
        %1067 = vmatprep.subr.mxu0 0.0
        %1068 = vmatpush1.msra.mxu0 0.0
        %1069 = vmatprep.subr.mxu0 0.0
        %1070 = vmatpush1.msra.mxu0 0.0
        %1071 = vmatprep.subr.mxu0 0.0
        %1072 = vmatpush1.msra.mxu0 0.0
        %1073 = vmatprep.subr.mxu0 0.0
        %1074 = vmatpush1.msra.mxu0 0.0
        %1075 = vmatprep.subr.mxu0 0.0
        %1076 = vmatpush1.msra.mxu0 0.0
        %1077 = vmatprep.subr.mxu0 0.0
        %1078 = vmatpush1.msra.mxu0 0.0
        %1079 = vmatprep.subr.mxu0 0.0
        %1080 = vmatpush1.msra.mxu0 0.0
        %1081 = vmatprep.subr.mxu0 0.0
        %1082 = vmatpush1.msra.mxu0 0.0
        %1083 = vmatprep.subr.mxu0 0.0
        %1084 = vmatpush1.msra.mxu0 0.0
        %1085 = vmatprep.subr.mxu0 0.0
        %1086 = vmatpush1.msra.mxu0 0.0
        %1087 = vmatprep.subr.mxu0 0.0
        %1088 = vmatpush1.msra.mxu0 0.0
        %1089 = vmatprep.subr.mxu0 0.0
        %1090 = vmatpush1.msra.mxu0 0.0
        %1091 = vmatprep.subr.mxu0 0.0
        %1092 = vmatpush1.msra.mxu0 0.0
        %1093 = vmatprep.subr.mxu0 0.0
        %1094 = vmatpush1.msra.mxu0 0.0
        %1095 = vmatprep.subr.mxu0 0.0
        %1096 = vmatpush1.msra.mxu0 0.0
        %1097 = vmatprep.subr.mxu0 0.0
        %1098 = vmatpush1.msra.mxu0 0.0
        %1099 = vmatprep.subr.mxu0 0.0
        %1100 = vmatpush1.msra.mxu0 0.0
        %1101 = vmatprep.subr.mxu0 0.0
        %1102 = vmatpush1.msra.mxu0 0.0
        %1103 = vmatprep.subr.mxu0 0.0
        %1104 = vmatpush1.msra.mxu0 0.0
        %1105 = vmatprep.subr.mxu0 0.0
        %1106 = vmatpush1.msra.mxu0 0.0
        %1107 = vmatprep.subr.mxu0 0.0
        %1108 = vmatpush1.msra.mxu0 0.0
        %1109 = vmatprep.subr.mxu0 0.0
        %1110 = vmatpush1.msra.mxu0 0.0
        %1111 = vmatprep.subr.mxu0 0.0
        %1112 = vmatpush1.msra.mxu0 0.0
        %1113 = vmatprep.subr.mxu0 0.0
        %1114 = vmatpush1.msra.mxu0 0.0
        %1115 = vmatprep.subr.mxu0 0.0
        %1116 = vmatpush1.msra.mxu0 0.0
        %1117 = vmatprep.subr.mxu0 0.0
        %1118 = vmatpush1.msra.mxu0 0.0
        %1119 = vmatprep.subr.mxu0 0.0
        %1120 = vmatpush1.msra.mxu0 0.0
        %1121 = vmatprep.subr.mxu0 0.0
        %1122 = vmatpush1.msra.mxu0 0.0
        %1123 = vmatprep.subr.mxu0 0.0
        %1124 = vmatpush1.msra.mxu0 0.0
        %1125 = vmatprep.subr.mxu0 0.0
        %1126 = vmatpush1.msra.mxu0 0.0
        %1127 = vmatprep.mubr.f32.mxu0 0.0
        %v1128 = vand.u32 %v961, 4294901760
        %1129 = vmatmul.mubr.f32.gmra.mrb[0].mxu0 %v1128
        %v1130 = vpop.f32.mrb[0].mxu0
        %v1131 = vadd.f32 %v1039, %v1130
        %v1132 = vpop.f32.mrb[0].mxu0
        %v1133 = vadd.f32 %v1041, %v1132
        %1134 = vdwg.mxu0
        %v1135 = vand.u32 %v956, 4294901760
        %v1136 = vsub.f32 %v956, %v1135
        %1137 = vmatprep.subr.mxu0 %v1136
        %v1138 = vand.u32 %v955, 4294901760
        %v1139 = vsub.f32 %v955, %v1138
        %1140 = vmatpush1.msra.mxu0 %v1139
        %v1141 = vand.u32 %v958, 4294901760
        %v1142 = vsub.f32 %v958, %v1141
        %1143 = vmatprep.subr.mxu0 %v1142
        %v1144 = vand.u32 %v957, 4294901760
        %v1145 = vsub.f32 %v957, %v1144
        %1146 = vmatpush1.msra.mxu0 %v1145
        %1147 = vmatprep.subr.mxu0 0.0
        %1148 = vmatpush1.msra.mxu0 0.0
        %1149 = vmatprep.subr.mxu0 0.0
        %1150 = vmatpush1.msra.mxu0 0.0
        %1151 = vmatprep.subr.mxu0 0.0
        %1152 = vmatpush1.msra.mxu0 0.0
        %1153 = vmatprep.subr.mxu0 0.0
        %1154 = vmatpush1.msra.mxu0 0.0
        %1155 = vmatprep.subr.mxu0 0.0
        %1156 = vmatpush1.msra.mxu0 0.0
        %1157 = vmatprep.subr.mxu0 0.0
        %1158 = vmatpush1.msra.mxu0 0.0
        %1159 = vmatprep.subr.mxu0 0.0
        %1160 = vmatpush1.msra.mxu0 0.0
        %1161 = vmatprep.subr.mxu0 0.0
        %1162 = vmatpush1.msra.mxu0 0.0
        %1163 = vmatprep.subr.mxu0 0.0
        %1164 = vmatpush1.msra.mxu0 0.0
        %1165 = vmatprep.subr.mxu0 0.0
        %1166 = vmatpush1.msra.mxu0 0.0
        %1167 = vmatprep.subr.mxu0 0.0
        %1168 = vmatpush1.msra.mxu0 0.0
        %1169 = vmatprep.subr.mxu0 0.0
        %1170 = vmatpush1.msra.mxu0 0.0
        %1171 = vmatprep.subr.mxu0 0.0
        %1172 = vmatpush1.msra.mxu0 0.0
        %1173 = vmatprep.subr.mxu0 0.0
        %1174 = vmatpush1.msra.mxu0 0.0
        %1175 = vmatprep.subr.mxu0 0.0
        %1176 = vmatpush1.msra.mxu0 0.0
        %1177 = vmatprep.subr.mxu0 0.0
        %1178 = vmatpush1.msra.mxu0 0.0
        %1179 = vmatprep.subr.mxu0 0.0
        %1180 = vmatpush1.msra.mxu0 0.0
        %1181 = vmatprep.subr.mxu0 0.0
        %1182 = vmatpush1.msra.mxu0 0.0
        %1183 = vmatprep.subr.mxu0 0.0
        %1184 = vmatpush1.msra.mxu0 0.0
        %1185 = vmatprep.subr.mxu0 0.0
        %1186 = vmatpush1.msra.mxu0 0.0
        %1187 = vmatprep.subr.mxu0 0.0
        %1188 = vmatpush1.msra.mxu0 0.0
        %1189 = vmatprep.subr.mxu0 0.0
        %1190 = vmatpush1.msra.mxu0 0.0
        %1191 = vmatprep.subr.mxu0 0.0
        %1192 = vmatpush1.msra.mxu0 0.0
        %1193 = vmatprep.subr.mxu0 0.0
        %1194 = vmatpush1.msra.mxu0 0.0
        %1195 = vmatprep.subr.mxu0 0.0
        %1196 = vmatpush1.msra.mxu0 0.0
        %1197 = vmatprep.subr.mxu0 0.0
        %1198 = vmatpush1.msra.mxu0 0.0
        %1199 = vmatprep.subr.mxu0 0.0
        %1200 = vmatpush1.msra.mxu0 0.0
        %1201 = vmatprep.subr.mxu0 0.0
        %1202 = vmatpush1.msra.mxu0 0.0
        %1203 = vmatprep.subr.mxu0 0.0
        %1204 = vmatpush1.msra.mxu0 0.0
        %1205 = vmatprep.subr.mxu0 0.0
        %1206 = vmatpush1.msra.mxu0 0.0
        %1207 = vmatprep.mubr.f32.mxu0 0.0
        %v1208 = vand.u32 %v961, 4294901760
        %v1209 = vsub.f32 %v961, %v1208
        %1210 = vmatmul.mubr.f32.gmra.mrb[0].mxu0 %v1209
        %v1211 = vpop.f32.mrb[0].mxu0
        %v1212 = vadd.f32 %v1131, %v1211
        %v1213 = vpop.f32.mrb[0].mxu0
        %v1214 = vadd.f32 %v1133, %v1213
        %1215 = vdwg.mxu0
        %v1216 = vand.u32 %v956, 4294901760
        %1217 = vmatprep.subr.mxu0 %v1216
        %v1218 = vand.u32 %v955, 4294901760
        %1219 = vmatpush1.msra.mxu0 %v1218
        %v1220 = vand.u32 %v958, 4294901760
        %1221 = vmatprep.subr.mxu0 %v1220
        %v1222 = vand.u32 %v957, 4294901760
        %1223 = vmatpush1.msra.mxu0 %v1222
        %1224 = vmatprep.subr.mxu0 0.0
        %1225 = vmatpush1.msra.mxu0 0.0
        %1226 = vmatprep.subr.mxu0 0.0
        %1227 = vmatpush1.msra.mxu0 0.0
        %1228 = vmatprep.subr.mxu0 0.0
        %1229 = vmatpush1.msra.mxu0 0.0
        %1230 = vmatprep.subr.mxu0 0.0
        %1231 = vmatpush1.msra.mxu0 0.0
        %1232 = vmatprep.subr.mxu0 0.0
        %1233 = vmatpush1.msra.mxu0 0.0
        %1234 = vmatprep.subr.mxu0 0.0
        %1235 = vmatpush1.msra.mxu0 0.0
        %1236 = vmatprep.subr.mxu0 0.0
        %1237 = vmatpush1.msra.mxu0 0.0
        %1238 = vmatprep.subr.mxu0 0.0
        %1239 = vmatpush1.msra.mxu0 0.0
        %1240 = vmatprep.subr.mxu0 0.0
        %1241 = vmatpush1.msra.mxu0 0.0
        %1242 = vmatprep.subr.mxu0 0.0
        %1243 = vmatpush1.msra.mxu0 0.0
        %1244 = vmatprep.subr.mxu0 0.0
        %1245 = vmatpush1.msra.mxu0 0.0
        %1246 = vmatprep.subr.mxu0 0.0
        %1247 = vmatpush1.msra.mxu0 0.0
        %1248 = vmatprep.subr.mxu0 0.0
        %1249 = vmatpush1.msra.mxu0 0.0
        %1250 = vmatprep.subr.mxu0 0.0
        %1251 = vmatpush1.msra.mxu0 0.0
        %1252 = vmatprep.subr.mxu0 0.0
        %1253 = vmatpush1.msra.mxu0 0.0
        %1254 = vmatprep.subr.mxu0 0.0
        %1255 = vmatpush1.msra.mxu0 0.0
        %1256 = vmatprep.subr.mxu0 0.0
        %1257 = vmatpush1.msra.mxu0 0.0
        %1258 = vmatprep.subr.mxu0 0.0
        %1259 = vmatpush1.msra.mxu0 0.0
        %1260 = vmatprep.subr.mxu0 0.0
        %1261 = vmatpush1.msra.mxu0 0.0
        %1262 = vmatprep.subr.mxu0 0.0
        %1263 = vmatpush1.msra.mxu0 0.0
        %1264 = vmatprep.subr.mxu0 0.0
        %1265 = vmatpush1.msra.mxu0 0.0
        %1266 = vmatprep.subr.mxu0 0.0
        %1267 = vmatpush1.msra.mxu0 0.0
        %1268 = vmatprep.subr.mxu0 0.0
        %1269 = vmatpush1.msra.mxu0 0.0
        %1270 = vmatprep.subr.mxu0 0.0
        %1271 = vmatpush1.msra.mxu0 0.0
        %1272 = vmatprep.subr.mxu0 0.0
        %1273 = vmatpush1.msra.mxu0 0.0
        %1274 = vmatprep.subr.mxu0 0.0
        %1275 = vmatpush1.msra.mxu0 0.0
        %1276 = vmatprep.subr.mxu0 0.0
        %1277 = vmatpush1.msra.mxu0 0.0
        %1278 = vmatprep.subr.mxu0 0.0
        %1279 = vmatpush1.msra.mxu0 0.0
        %1280 = vmatprep.subr.mxu0 0.0
        %1281 = vmatpush1.msra.mxu0 0.0
        %1282 = vmatprep.subr.mxu0 0.0
        %1283 = vmatpush1.msra.mxu0 0.0
        %1284 = vmatprep.mubr.f32.mxu0 0.0
        %v1285 = vand.u32 %v961, 4294901760
        %v1286 = vsub.f32 %v961, %v1285
        %v1287 = vand.u32 %v1286, 4294901760
        %1288 = vmatmul.mubr.f32.gmra.mrb[0].mxu0 %v1287
        %v1289 = vpop.f32.mrb[0].mxu0
        %v1290 = vadd.f32 %v1212, %v1289
        %v1291 = vpop.f32.mrb[0].mxu0
        %v1292 = vadd.f32 %v1214, %v1291
        %1293 = vdwg.mxu0
        %v1294 = vand.u32 %v956, 4294901760
        %v1295 = vsub.f32 %v956, %v1294
        %v1296 = vand.u32 %v1295, 4294901760
        %1297 = vmatprep.subr.mxu0 %v1296
        %v1298 = vand.u32 %v955, 4294901760
        %v1299 = vsub.f32 %v955, %v1298
        %v1300 = vand.u32 %v1299, 4294901760
        %1301 = vmatpush1.msra.mxu0 %v1300
        %v1302 = vand.u32 %v958, 4294901760
        %v1303 = vsub.f32 %v958, %v1302
        %v1304 = vand.u32 %v1303, 4294901760
        %1305 = vmatprep.subr.mxu0 %v1304
        %v1306 = vand.u32 %v957, 4294901760
        %v1307 = vsub.f32 %v957, %v1306
        %v1308 = vand.u32 %v1307, 4294901760
        %1309 = vmatpush1.msra.mxu0 %v1308
        %1310 = vmatprep.subr.mxu0 0.0
        %1311 = vmatpush1.msra.mxu0 0.0
        %1312 = vmatprep.subr.mxu0 0.0
        %1313 = vmatpush1.msra.mxu0 0.0
        %1314 = vmatprep.subr.mxu0 0.0
        %1315 = vmatpush1.msra.mxu0 0.0
        %1316 = vmatprep.subr.mxu0 0.0
        %1317 = vmatpush1.msra.mxu0 0.0
        %1318 = vmatprep.subr.mxu0 0.0
        %1319 = vmatpush1.msra.mxu0 0.0
        %1320 = vmatprep.subr.mxu0 0.0
        %1321 = vmatpush1.msra.mxu0 0.0
        %1322 = vmatprep.subr.mxu0 0.0
        %1323 = vmatpush1.msra.mxu0 0.0
        %1324 = vmatprep.subr.mxu0 0.0
        %1325 = vmatpush1.msra.mxu0 0.0
        %1326 = vmatprep.subr.mxu0 0.0
        %1327 = vmatpush1.msra.mxu0 0.0
        %1328 = vmatprep.subr.mxu0 0.0
        %1329 = vmatpush1.msra.mxu0 0.0
        %1330 = vmatprep.subr.mxu0 0.0
        %1331 = vmatpush1.msra.mxu0 0.0
        %1332 = vmatprep.subr.mxu0 0.0
        %1333 = vmatpush1.msra.mxu0 0.0
        %1334 = vmatprep.subr.mxu0 0.0
        %1335 = vmatpush1.msra.mxu0 0.0
        %1336 = vmatprep.subr.mxu0 0.0
        %1337 = vmatpush1.msra.mxu0 0.0
        %1338 = vmatprep.subr.mxu0 0.0
        %1339 = vmatpush1.msra.mxu0 0.0
        %1340 = vmatprep.subr.mxu0 0.0
        %1341 = vmatpush1.msra.mxu0 0.0
        %1342 = vmatprep.subr.mxu0 0.0
        %1343 = vmatpush1.msra.mxu0 0.0
        %1344 = vmatprep.subr.mxu0 0.0
        %1345 = vmatpush1.msra.mxu0 0.0
        %1346 = vmatprep.subr.mxu0 0.0
        %1347 = vmatpush1.msra.mxu0 0.0
        %1348 = vmatprep.subr.mxu0 0.0
        %1349 = vmatpush1.msra.mxu0 0.0
        %1350 = vmatprep.subr.mxu0 0.0
        %1351 = vmatpush1.msra.mxu0 0.0
        %1352 = vmatprep.subr.mxu0 0.0
        %1353 = vmatpush1.msra.mxu0 0.0
        %1354 = vmatprep.subr.mxu0 0.0
        %1355 = vmatpush1.msra.mxu0 0.0
        %1356 = vmatprep.subr.mxu0 0.0
        %1357 = vmatpush1.msra.mxu0 0.0
        %1358 = vmatprep.subr.mxu0 0.0
        %1359 = vmatpush1.msra.mxu0 0.0
        %1360 = vmatprep.subr.mxu0 0.0
        %1361 = vmatpush1.msra.mxu0 0.0
        %1362 = vmatprep.subr.mxu0 0.0
        %1363 = vmatpush1.msra.mxu0 0.0
        %1364 = vmatprep.subr.mxu0 0.0
        %1365 = vmatpush1.msra.mxu0 0.0
        %1366 = vmatprep.subr.mxu0 0.0
        %1367 = vmatpush1.msra.mxu0 0.0
        %1368 = vmatprep.subr.mxu0 0.0
        %1369 = vmatpush1.msra.mxu0 0.0
        %1370 = vmatprep.mubr.f32.mxu0 0.0
        %v1371 = vand.u32 %v961, 4294901760
        %1372 = vmatmul.mubr.f32.gmra.mrb[0].mxu0 %v1371
        %v1373 = vpop.f32.mrb[0].mxu0
        %v1374 = vadd.f32 %v1290, %v1373
        %v1375 = vpop.f32.mrb[0].mxu0
        %v1376 = vadd.f32 %v1292, %v1375
        %1377 = vdwg.mxu0
        %v1378 = vand.u32 %v956, 4294901760
        %1379 = vmatprep.subr.mxu0 %v1378
        %v1380 = vand.u32 %v955, 4294901760
        %1381 = vmatpush1.msra.mxu0 %v1380
        %v1382 = vand.u32 %v958, 4294901760
        %1383 = vmatprep.subr.mxu0 %v1382
        %v1384 = vand.u32 %v957, 4294901760
        %1385 = vmatpush1.msra.mxu0 %v1384
        %1386 = vmatprep.subr.mxu0 0.0
        %1387 = vmatpush1.msra.mxu0 0.0
        %1388 = vmatprep.subr.mxu0 0.0
        %1389 = vmatpush1.msra.mxu0 0.0
        %1390 = vmatprep.subr.mxu0 0.0
        %1391 = vmatpush1.msra.mxu0 0.0
        %1392 = vmatprep.subr.mxu0 0.0
        %1393 = vmatpush1.msra.mxu0 0.0
        %1394 = vmatprep.subr.mxu0 0.0
        %1395 = vmatpush1.msra.mxu0 0.0
        %1396 = vmatprep.subr.mxu0 0.0
        %1397 = vmatpush1.msra.mxu0 0.0
        %1398 = vmatprep.subr.mxu0 0.0
        %1399 = vmatpush1.msra.mxu0 0.0
        %1400 = vmatprep.subr.mxu0 0.0
        %1401 = vmatpush1.msra.mxu0 0.0
        %1402 = vmatprep.subr.mxu0 0.0
        %1403 = vmatpush1.msra.mxu0 0.0
        %1404 = vmatprep.subr.mxu0 0.0
        %1405 = vmatpush1.msra.mxu0 0.0
        %1406 = vmatprep.subr.mxu0 0.0
        %1407 = vmatpush1.msra.mxu0 0.0
        %1408 = vmatprep.subr.mxu0 0.0
        %1409 = vmatpush1.msra.mxu0 0.0
        %1410 = vmatprep.subr.mxu0 0.0
        %1411 = vmatpush1.msra.mxu0 0.0
        %1412 = vmatprep.subr.mxu0 0.0
        %1413 = vmatpush1.msra.mxu0 0.0
        %1414 = vmatprep.subr.mxu0 0.0
        %1415 = vmatpush1.msra.mxu0 0.0
        %1416 = vmatprep.subr.mxu0 0.0
        %1417 = vmatpush1.msra.mxu0 0.0
        %1418 = vmatprep.subr.mxu0 0.0
        %1419 = vmatpush1.msra.mxu0 0.0
        %1420 = vmatprep.subr.mxu0 0.0
        %1421 = vmatpush1.msra.mxu0 0.0
        %1422 = vmatprep.subr.mxu0 0.0
        %1423 = vmatpush1.msra.mxu0 0.0
        %1424 = vmatprep.subr.mxu0 0.0
        %1425 = vmatpush1.msra.mxu0 0.0
        %1426 = vmatprep.subr.mxu0 0.0
        %1427 = vmatpush1.msra.mxu0 0.0
        %1428 = vmatprep.subr.mxu0 0.0
        %1429 = vmatpush1.msra.mxu0 0.0
        %1430 = vmatprep.subr.mxu0 0.0
        %1431 = vmatpush1.msra.mxu0 0.0
        %1432 = vmatprep.subr.mxu0 0.0
        %1433 = vmatpush1.msra.mxu0 0.0
        %1434 = vmatprep.subr.mxu0 0.0
        %1435 = vmatpush1.msra.mxu0 0.0
        %1436 = vmatprep.subr.mxu0 0.0
        %1437 = vmatpush1.msra.mxu0 0.0
        %1438 = vmatprep.subr.mxu0 0.0
        %1439 = vmatpush1.msra.mxu0 0.0
        %1440 = vmatprep.subr.mxu0 0.0
        %1441 = vmatpush1.msra.mxu0 0.0
        %1442 = vmatprep.subr.mxu0 0.0
        %1443 = vmatpush1.msra.mxu0 0.0
        %1444 = vmatprep.subr.mxu0 0.0
        %1445 = vmatpush1.msra.mxu0 0.0
        %1446 = vmatprep.mubr.f32.mxu0 0.0
        %v1447 = vand.u32 %v961, 4294901760
        %1448 = vmatmul.mubr.f32.gmra.mrb[0].mxu0 %v1447
        %v1449 = vpop.f32.mrb[0].mxu0
        %v1450 = vadd.f32 %v1374, %v1449
        %v1451 = vpop.f32.mrb[0].mxu0
        %v1452 = vadd.f32 %v1376, %v1451
        %1453 = vdwg.mxu0
        %v1456 = vcombine.low %v1450, %v1452
        %1458 = vst [vmem:[%s306] sm:$0xff] %v1456
        %v1459 = vcombine.low %v935, %v946
        %v1461 = vunpack.c.l.s4 1966171168
        %v1462 = vunpack.c.0.s8 %v1461
        %v1463 = vlaneseq
        %v1464 = vshrl.u32 %v1463, 7
        %v1465 = vsub.s32 %v1462, %v1464
        %v1466 = vrot.slane %v1459, %v1465
        %v1468 = vunpack.c.l.s4 1966171168
        %v1469 = vunpack.c.0.s8 %v1468
        %v1470 = vlaneseq
        %v1471 = vshrl.u32 %v1470, 7
        %v1472 = vsub.s32 %v1469, %v1471
        %v1473 = vrot.slane %v1466, %v1472
        %v1474 = vlaneseq
        %vm1475 = vcmp.ge.s32.totalorder %v1474, 0
        %vm1476 = vcmp.lt.s32.totalorder %v1474, 256
        %vm1477 = vmand %vm1475, %vm1476
        %1478 = vst.msk [vmem:[%s313] sm:$0x3] %vm1477, %v1473
        %v1479 = vlaneseq
        %v1480 = vand.u32 %v1479, 127
        %v1481 = vadd.s32 %v1480, 128
        %s1482 = smul.u32 %s30, 256
        %v1483 = vstv %s1482
        %v1484 = vadd.s32 %v1480, %v1483
        %v1485 = vadd.s32 %v1481, %v1483
        %vm1486 = vcmp.lt.s32.totalorder %v1484, 256
        %vm1487 = vcmp.lt.s32.totalorder %v1485, 256
        %v1489 = vsub.f32 %v1450, %v352
        %v1490 = vsub.f32 %v1452, %v359
        %v1491 = vmul.f32 %v1489, %v1489
        %v1492 = vmul.f32 %v1490, %v1490
        %v1493 = vsel %vm1486, 1, 0
        %v1494 = vsel %vm1487, 1, 0
        %vm1495 = vcmp.eq.s32.totalorder %v1493, 1
        %vm1496 = vcmp.eq.s32.totalorder %v1494, 1
        %v1497 = vsel %vm1495, %v1491, 0.0
        %v1498 = vsel %vm1496, %v1492, 0.0
        %v1499 = vsel %vm367, %v1497, 0.0
        %v1500 = vsel %vm367, %v1498, 0.0
        %v1501 = vadd.f32 %v1499, %v1500
        %1502 = vadd.xlane.f32.xlu0 %v1501
        %v1503 = vpop.xlane.xlu0 %1502
        %v1504 = vsel %vm367, %v1503, 0.0
        %v1505 = vrot.slane %v1504, 4
        %v1506 = vadd.f32 %v1504, %v1505
        %v1507 = vrot.slane %v1506, 2
        %v1508 = vadd.f32 %v1506, %v1507
        %v1509 = vrot.slane %v1508, 1
        %v1510 = vadd.f32 %v1508, %v1509
        %1511 = vst [vmem:[%s319] sm:$0x1] %v1510
        %v1512 = vsel %vm1495, %v955, 0.0
        %v1513 = vsel %vm1496, %v956, 0.0
        %v1514 = vsel %vm1495, %v957, 0.0
        %v1515 = vsel %vm1496, %v958, 0.0
        %v1516 = vadd.f32 %v1512, %v1513
        %1517 = vadd.xlane.f32.xlu0 %v1516
        %v1518 = vpop.xlane.xlu0 %1517
        %v1519 = vadd.f32 %v1514, %v1515
        %1520 = vadd.xlane.f32.xlu0 %v1519
        %v1521 = vpop.xlane.xlu0 %1520
        %vm1522 = vcmask 7168
        %1523 = vst.msk [vmem:[%s351] sm:$0xff] %vm1522, %v1518
        %1524 = vst.msk [vmem:[%s351 + $0x8] sm:$0xff] %vm1522, %v1521
        %s1525 = sand.u32 %s138, 1
        %s1526 = scalar_lea.sflag [#allocation3], %s1525
        %s1527 = sand.u32 %s138, 1
        %s1528 = smul.addr %s1527, 8
        %s1529 = scalar_lea.vmem [#allocation2], %s1528
        %s1530 = sand.u32 %s25, 1
        %s1531 = scalar_lea.sflag [#allocation5], %s1530
        %s1532 = sand.u32 %s166, 1
        %s1533 = smul.addr %s1532, 2
        %s1534 = scalar_lea.vmem [#allocation4], %s1533
        %s1535 = sand.u32 %s25, 1
        %s1536 = scalar_lea.sflag [#allocation5], %s1535
        %s1537 = sand.u32 %s194, 1
        %s1538 = scalar_lea.vmem [#allocation6], %s1537
        %p1539 = scmp.lt.s32.totalorder %s29, 1
        %s1540 = scalar_select %p1539, %s29, 1
        %p1541 = scmp.lt.s32.totalorder %s30, 0
        %s1542 = scalar_select %p1541, %s30, 0
        %s1543 = smul.addr %s1542, 2
        %s1544 = smul.addr %s1540, 2
        %s1545 = sadd.s32 %s1543, %s1544
        %s1546 = smul.addr %s1545, 8
        %s1547 = scalar_lea.vmem %s7, %s1546
        // Predicated region
        $region37: #{tpu_custom_call.1} parent=35 // pred_check
          %p1548 = pneg %p148
        $region38: #{tpu_custom_call.1} parent=35 // pred_check_branch
          %1550 = sbr.rel (%p1548) target = $region40
        $region39: #{tpu_custom_call.1} parent=35 // pred_region
          %s1551 = smul.u32 2, %s30
          %s1553 = ssub.s32 128, 128
          %1554 = vsyncadd %s1526, %s1553
          %s1555 = smul.addr %s29, 2
          %s1556 = sadd.s32 %s1551, %s1555
          %s1557 = smul.addr %s1556, 64
          %s1558 = scalar_lea.hbm %s4, %s1557
          %s1560 = sshll.u32 %s1529, 4
          %s1561 = int_to_ptr.vmem [resolvable:$true] %s1560
          %1563 = dma.vmem_to_hbm [thread:$0]  %s1561, 128, %s1558, %s1526
        $region40: #{tpu_custom_call.1} parent=35 // pred_fallthru
          _
        // Predicated region
        $region41: #{tpu_custom_call.1} parent=35 // pred_check
          %p1564 = pneg %p176
        $region42: #{tpu_custom_call.1} parent=35 // pred_check_branch
          %1566 = sbr.rel (%p1564) target = $region44
        $region43: #{tpu_custom_call.1} parent=35 // pred_region
          %s1567 = smul.u32 2, %s30
          %s1569 = ssub.s32 32, 32
          %1570 = vsyncadd %s1531, %s1569
          %s1571 = smul.addr %s29, 2
          %s1572 = sadd.s32 %s1567, %s1571
          %s1573 = smul.addr %s1572, 16
          %s1574 = scalar_lea.hbm %s5, %s1573
          %s1576 = sshll.u32 %s1534, 4
          %s1577 = int_to_ptr.vmem [resolvable:$true] %s1576
          %1579 = dma.vmem_to_hbm [thread:$0]  %s1577, 32, %s1574, %s1531
        $region44: #{tpu_custom_call.1} parent=35 // pred_fallthru
          _
        // Predicated region
        $region45: #{tpu_custom_call.1} parent=35 // pred_check
          %p1580 = pneg %p204
        $region46: #{tpu_custom_call.1} parent=35 // pred_check_branch
          %1582 = sbr.rel (%p1580) target = $region48
        $region47: #{tpu_custom_call.1} parent=35 // pred_region
          %s1584 = ssub.s32 16, 16
          %1585 = vsyncadd %s1536, %s1584
          %s1586 = sadd.s32 %s30, %s29
          %s1587 = smul.addr %s1586, 16
          %s1588 = scalar_lea.hbm %s6, %s1587
          %s1590 = sshll.u32 %s1538, 4
          %s1591 = int_to_ptr.vmem [resolvable:$true] %s1590
          %1593 = dma.vmem_to_hbm [thread:$0]  %s1591, 16, %s1588, %s1536
        $region48: #{tpu_custom_call.1} parent=35 // pred_fallthru
          _
        // Predicated region
        $region49: #{tpu_custom_call.1} parent=35 // pred_check
          %p1594 = pneg %p232
        $region50: #{tpu_custom_call.1} parent=35 // pred_check_branch
          %1596 = sbr.rel (%p1594) target = $region52
        $region51: #{tpu_custom_call.1} parent=35 // pred_region
          _
        $region52: #{tpu_custom_call.1} parent=35 // pred_fallthru
          _
      $region36: #{tpu_custom_call.1} parent=5 // pred_fallthru
        _
      %p1597 = scmp.le.s32.totalorder 2, %s20
      // Predicated region
      $region53: #{tpu_custom_call.1} parent=5 // pred_check
        %p1598 = pneg %p1597
      $region54: #{tpu_custom_call.1} parent=5 // pred_check_branch
        %1600 = sbr.rel (%p1598) target = $region56
      $region55: #{tpu_custom_call.1} parent=5 // pred_region
        %s1601 = ssub.s32 %s20, 2
        // Predicated region
        $region57: #{tpu_custom_call.1} parent=55 // pred_check
          %p1602 = pneg %p154
        $region58: #{tpu_custom_call.1} parent=55 // pred_check_branch
          %1604 = sbr.rel (%p1602) target = $region60
        $region59: #{tpu_custom_call.1} parent=55 // pred_region
          %s1605 = sand.u32 %s139, 1
          %s1606 = scalar_lea.sflag [#allocation3], %s1605
          %s1607 = sand.u32 %s139, 1
          %s1608 = smul.addr %s1607, 8
          %s1609 = scalar_lea.vmem [#allocation2], %s1608
          %1610 = dma.done %s1606, 128
        $region60: #{tpu_custom_call.1} parent=55 // pred_fallthru
          _
        // Predicated region
        $region61: #{tpu_custom_call.1} parent=55 // pred_check
          %p1611 = pneg %p182
        $region62: #{tpu_custom_call.1} parent=55 // pred_check_branch
          %1613 = sbr.rel (%p1611) target = $region64
        $region63: #{tpu_custom_call.1} parent=55 // pred_region
          %s1614 = sand.u32 %s26, 1
          %s1615 = scalar_lea.sflag [#allocation5], %s1614
          %s1616 = sand.u32 %s167, 1
          %s1617 = smul.addr %s1616, 2
          %s1618 = scalar_lea.vmem [#allocation4], %s1617
          %1619 = dma.done %s1615, 32
        $region64: #{tpu_custom_call.1} parent=55 // pred_fallthru
          _
        // Predicated region
        $region65: #{tpu_custom_call.1} parent=55 // pred_check
          %p1620 = pneg %p210
        $region66: #{tpu_custom_call.1} parent=55 // pred_check_branch
          %1622 = sbr.rel (%p1620) target = $region68
        $region67: #{tpu_custom_call.1} parent=55 // pred_region
          %s1623 = sand.u32 %s26, 1
          %s1624 = scalar_lea.sflag [#allocation5], %s1623
          %s1625 = sand.u32 %s195, 1
          %s1626 = scalar_lea.vmem [#allocation6], %s1625
          %1627 = dma.done %s1624, 16
        $region68: #{tpu_custom_call.1} parent=55 // pred_fallthru
          _
        // Predicated region
        $region69: #{tpu_custom_call.1} parent=55 // pred_check
          %p1628 = pneg %p238
        $region70: #{tpu_custom_call.1} parent=55 // pred_check_branch
          %1630 = sbr.rel (%p1628) target = $region72
        $region71: #{tpu_custom_call.1} parent=55 // pred_region
          %p1631 = scmp.lt.s32.totalorder %s31, 1
          %s1632 = scalar_select %p1631, %s31, 1
          %p1633 = scmp.lt.s32.totalorder %s32, 0
          %s1634 = scalar_select %p1633, %s32, 0
          %s1635 = smul.addr %s1634, 2
          %s1636 = smul.addr %s1632, 2
          %s1637 = sadd.s32 %s1635, %s1636
          %s1638 = smul.addr %s1637, 8
          %s1639 = scalar_lea.vmem %s7, %s1638
        $region72: #{tpu_custom_call.1} parent=55 // pred_fallthru
          _
      $region56: #{tpu_custom_call.1} parent=5 // pred_fallthru
        _
    $region6: #{tpu_custom_call.1} parent=1 // loop_footer
      %s24 = sadd.s32 1, %s20
    $region7: #{tpu_custom_call.1} parent=1 // loop_footer_branch
      %19 = sbr.rel target = $region3
    $region8: #{tpu_custom_call.1} parent=1 // loop_exit
      _
    %1640 = vsyncpa [#allocation3], 1
    %s1641 = scalar_lea.sflag [#allocation3], 1
    %1642 = vsyncpa %s1641, 1
    %1643 = vsyncpa [#allocation5], 1
    %s1644 = scalar_lea.sflag [#allocation5], 1
    %1645 = vsyncpa %s1644, 1

</llo_original>
